<compile_context>
chip_gen: v5e
topology: v5e:2x2
jax: 0.10.0
libtpu: 0.0.40
codegen_flags: <defaults>
</compile_context>

<pallas_src>
import functools

import jax
import jax.numpy as jnp
from jax.experimental import pallas as pl
from jax.experimental.pallas import tpu as pltpu


def _round_up(x, m):
    return (x + m - 1) // m * m


def _im2col_weight(w):
    """(3, 3, Cin, Cout) -> (Cout, 9*Cin), K index = (kh*3 + kw)*Cin + cin."""
    cout = w.shape[3]
    return jnp.transpose(w, (3, 0, 1, 2)).reshape(cout, -1)


def _is_single_tensorcore_chip():
    """True for v5e / v6e style single-TC chips (fold batch into lanes there)."""
    try:
        kind = jax.devices()[0].device_kind.lower()
    except Exception:  # pragma: no cover - conservative fallback
        return False
    return ("v5e" in kind) or ("v6e" in kind) or ("lite" in kind)


# ----------------------------------------------------------------------------
# Fused Pallas kernel: enc1 -> enc2 -> (subsample∘upsample) -> dec -> head
# ----------------------------------------------------------------------------
def _mmit_fused_kernel(x_ref, masks_ref, oddc_ref, oddr_ref,
                       w1_ref, b1_ref, w2_ref, b2_ref,
                       wd_ref, bd_ref, wh_ref, bh_ref,
                       o_ref, pbuf, *, W):
    """One grid step; all intermediates stay in vregs / VMEM scratch.

    x_ref    : (1, Cin_p, L)   channels on sublanes, flattened pixels on lanes
    masks_ref: (9, L)          per-tap 'same'-padding validity masks (0/1)
    odd*_ref : (1, L)          column / row parity masks (0/1) for the upsample
    w*_ref   : im2col conv weights (Cout, 9*Cin) in bf16; wh_ref is the f32 head
    o_ref    : (1, NC, L)
    pbuf     : bf16 VMEM patch-matrix scratch (9*(C1+C2) rows)
    """
    f32 = jnp.float32
    L = x_ref.shape[-1]

    # Hoisted grid-invariant loads (reused across all three patch builds).
    masks = masks_ref[...]                          # (9, L)
    mrow = [masks[t:t + 1, :] for t in range(9)]    # nine (1, L) rows
    odd_c = oddc_ref[...]                           # (1, L)
    odd_r = oddr_ref[...]                           # (1, L)
    b1 = b1_ref[...]
    b2 = b2_ref[...]
    bd = bd_ref[...]
    bh = bh_ref[...]

    def build_patches(v, row0):
        # im2col: for each 3x3 tap, ONE aligned full-width masked store:
        #   pbuf[row0 + tap*C + c, p] = v[c, p + dh*W + dw] if that pixel is
        #   inside the image at output pixel p, else 0.
        # pltpu.roll is an XLU lane rotate; the masks zero exactly the lanes
        # where the rotate wrapped or left the image, so no partial stores and
        # no staging buffer are needed.
        C = v.shape[0]
        tap = 0
        for dh in (-1, 0, 1):
            for dw in (-1, 0, 1):
                d = dh * W + dw
                r0 = row0 + tap * C
                if d == 0:                            # centre tap: always valid
                    pbuf[r0:r0 + C, :] = v.astype(pbuf.dtype)
                else:
                    shifted = pltpu.roll(v, (-d) % L, axis=1)
                    pbuf[r0:r0 + C, :] = (shifted * mrow[tap]).astype(pbuf.dtype)
                tap += 1

    def conv_relu(w_ref, b):
        # (Cout, K) bf16 @ (K, L) bf16 im2col matmul, f32 accumulation,
        # then f32 bias + ReLU on the VPU.
        k = w_ref.shape[1]
        y = jnp.dot(w_ref[...], pbuf[0:k, :], preferred_element_type=f32)
        return jnp.maximum(y + b, 0.0)

    x = x_ref[0]                                      # (Cin_p, L) f32
    k2 = w2_ref.shape[1]                              # 9 * C1

    # encoder stage 1: 3x3 / stride 1 / pad 1 + ReLU (full resolution)
    build_patches(x, 0)
    f1 = conv_relu(w1_ref, b1)                        # (C1, L)

    # encoder stage 2: 3x3 / stride 2 / pad 1 + ReLU, computed as the
    # full-resolution 'same' conv (f1 patches are reused by the decoder) ...
    build_patches(f1, 0)
    f2_full = conv_relu(w2_ref, b2)                   # (C2, L)

    # ... then "subsample even pixels + nearest-2x upsample" as two lane
    # rotates + exact 0/1 parity selects (XLU/VPU, replaces the old (HW,HW)
    # permutation matmul):  up[h, w] = f2_full[h - h%2, w - w%2].
    col = f2_full + odd_c * (pltpu.roll(f2_full, 1, axis=1) - f2_full)
    up = col + odd_r * (pltpu.roll(col, W, axis=1) - col)          # (C2, L)

    # decoder: conv3x3(concat([f1, up])) + ReLU as ONE matmul on the stacked
    # patch matrix (rows [0, 9*C1) = f1 taps, rows [9*C1, 9*(C1+C2)) = up taps)
    build_patches(up, k2)
    dec = conv_relu(wd_ref, bd)                       # (Cdec, L)

    # head: 1x1 conv == (NC, Cdec) @ (Cdec, L); kept f32 (K tiny), lane-dense.
    out = jnp.dot(wh_ref[...], dec, preferred_element_type=f32) + bh
    o_ref[0] = out.astype(o_ref.dtype)


# ----------------------------------------------------------------------------
# Wrapper: layout plumbing + constant tables + pallas_call
# ----------------------------------------------------------------------------
def mmit_forward_fused(params, x_nchw, fold_batch=None):
    N, cin, H, W = x_nchw.shape
    HW = H * W
    c1 = params["enc1_w"].shape[3]
    c2 = params["enc2_w"].shape[3]
    cdec = params["dec_w"].shape[3]
    nc = params["head_w"].shape[1]
    cin_p = _round_up(cin, 8)          # pad input channels to a full sublane tile

    if fold_batch is None:
        fold_batch = _is_single_tensorcore_chip()

    # Activations: NCHW -> (N, Cin_p, H*W); flattened pixels on lanes.
    x_flat = x_nchw.astype(jnp.float32).reshape(N, cin, HW)
    x_flat = jnp.pad(x_flat, ((0, 0), (0, cin_p - cin), (0, 0)))

    if fold_batch:
        # Single-TC chips: batch folded into the lane axis -> one grid step.
        grid_n, L = 1, N * HW
        x_in = jnp.transpose(x_flat, (1, 0, 2)).reshape(1, cin_p, L)
    else:
        # Multi-core chips (v7x / megacore): one batch element per grid step.
        grid_n, L = N, HW
        x_in = x_flat

    # Weights in im2col layout (Cout, 9*Cin), cast once to bf16 for the MXU.
    # Decoder weight split to match the stacked [f1-patches ; up-patches]
    # buffer (replaces the channel concat).  Head stays f32.
    bf16 = jnp.bfloat16
    w1 = _im2col_weight(jnp.pad(params["enc1_w"],
                                ((0, 0), (0, 0), (0, cin_p - cin), (0, 0)))
                        ).astype(bf16)
    w2 = _im2col_weight(params["enc2_w"]).astype(bf16)
    wd = jnp.concatenate([_im2col_weight(params["dec_w"][:, :, :c1, :]),
                          _im2col_weight(params["dec_w"][:, :, c1:, :])],
                         axis=1).astype(bf16)
    wh = params["head_w"].T.astype(jnp.float32)
    b1 = params["enc1_b"].reshape(c1, 1).astype(jnp.float32)
    b2 = params["enc2_b"].reshape(c2, 1).astype(jnp.float32)
    bd = params["dec_b"].reshape(cdec, 1).astype(jnp.float32)
    bh = params["head_b"].reshape(nc, 1).astype(jnp.float32)

    # Constant per-pixel tables (shape-only; constant-folded by XLA), periodic
    # per image so they are simply tiled when the batch is folded into lanes:
    #  - masks[tap, p]: 1 iff 3x3 tap (dh, dw) stays inside the image at p
    #  - odd_c / odd_r: column / row parity (drive the upsample selects)
    pos = jnp.arange(HW, dtype=jnp.int32)
    hh, ww = pos // W, pos % W
    rows = []
    for dh in (-1, 0, 1):
        for dw in (-1, 0, 1):
            rows.append(((hh + dh >= 0) & (hh + dh < H)
                         & (ww + dw >= 0) & (ww + dw < W)).astype(jnp.float32))
    masks = jnp.stack(rows, axis=0)                         # (9, HW)
    odd_c = (ww % 2).astype(jnp.float32).reshape(1, HW)
    odd_r = (hh % 2).astype(jnp.float32).reshape(1, HW)
    reps = L // HW
    if reps > 1:
        masks = jnp.tile(masks, (1, reps))
        odd_c = jnp.tile(odd_c, (1, reps))
        odd_r = jnp.tile(odd_r, (1, reps))

    kernel = functools.partial(_mmit_fused_kernel, W=W)
    patch_rows = 9 * max(cin_p, c1 + c2)

    out_flat = pl.pallas_call(
        kernel,
        out_shape=jax.ShapeDtypeStruct((grid_n, nc, L), jnp.float32),
        grid=(grid_n,),
        in_specs=[
            pl.BlockSpec((1, cin_p, L), lambda n: (n, 0, 0)),
            pl.BlockSpec((9, L), lambda n: (0, 0)),
            pl.BlockSpec((1, L), lambda n: (0, 0)),
            pl.BlockSpec((1, L), lambda n: (0, 0)),
            pl.BlockSpec(w1.shape, lambda n: (0, 0)),
            pl.BlockSpec(b1.shape, lambda n: (0, 0)),
            pl.BlockSpec(w2.shape, lambda n: (0, 0)),
            pl.BlockSpec(b2.shape, lambda n: (0, 0)),
            pl.BlockSpec(wd.shape, lambda n: (0, 0)),
            pl.BlockSpec(bd.shape, lambda n: (0, 0)),
            pl.BlockSpec(wh.shape, lambda n: (0, 0)),
            pl.BlockSpec(bh.shape, lambda n: (0, 0)),
        ],
        out_specs=pl.BlockSpec((1, nc, L), lambda n: (n, 0, 0)),
        scratch_shapes=[pltpu.VMEM((patch_rows, L), bf16)],
        compiler_params=pltpu.CompilerParams(
            dimension_semantics=("parallel",)),
    )(x_in, masks, odd_c, odd_r, w1, b1, w2, b2, wd, bd, wh, bh)

    if fold_batch:
        out = out_flat.reshape(nc, N, HW).transpose(1, 0, 2)
    else:
        out = out_flat
    # (..., H*W) -> NCHW: a pure reshape on the kernel output layout.
    return out.reshape(N, nc, H, W)


mmit_forward = jax.jit(mmit_forward_fused, static_argnames=("fold_batch",))


# ----------------------------------------------------------------------------
# Model params + pure-JAX reference (for a correctness check)
# ----------------------------------------------------------------------------
def init_params(key, cin=4, c1=8, c2=16, cdec=16, n_classes=3):
    ks = jax.random.split(key, 8)

    def conv_init(k, ci, co):
        return jax.random.normal(k, (3, 3, ci, co), jnp.float32) / jnp.sqrt(9 * ci)

    return {
        "enc1_w": conv_init(ks[0], cin, c1),
        "enc1_b": 0.01 * jax.random.normal(ks[1], (c1,), jnp.float32),
        "enc2_w": conv_init(ks[2], c1, c2),
        "enc2_b": 0.01 * jax.random.normal(ks[3], (c2,), jnp.float32),
        "dec_w": conv_init(ks[4], c1 + c2, cdec),
        "dec_b": 0.01 * jax.random.normal(ks[5], (cdec,), jnp.float32),
        "head_w": jax.random.normal(ks[6], (cdec, n_classes), jnp.float32)
                  / jnp.sqrt(cdec),
        "head_b": 0.01 * jax.random.normal(ks[7], (n_classes,), jnp.float32),
    }


@jax.jit
def reference_forward(params, x):
    """Pure-JAX (XLA) reference of the same encoder -> decoder -> head forward."""
    def conv(v, w, b, stride):
        y = jax.lax.conv_general_dilated(
            v, w, window_strides=(stride, stride), padding=((1, 1), (1, 1)),
            dimension_numbers=("NCHW", "HWIO", "NCHW"),
            precision=jax.lax.Precision.HIGHEST)
        return y + b.reshape(1, -1, 1, 1)

    f1 = jax.nn.relu(conv(x, params["enc1_w"], params["enc1_b"], 1))
    f2 = jax.nn.relu(conv(f1, params["enc2_w"], params["enc2_b"], 2))
    up = jnp.repeat(jnp.repeat(f2, 2, axis=2), 2, axis=3)
    cat = jnp.concatenate([f1, up], axis=1)
    dec = jax.nn.relu(conv(cat, params["dec_w"], params["dec_b"], 1))
    out = jnp.einsum("nchw,co->nohw", dec, params["head_w"],
                     precision=jax.lax.Precision.HIGHEST)
    return out + params["head_b"].reshape(1, -1, 1, 1)


if __name__ == "__main__":
    key = jax.random.PRNGKey(0)
    k_param, k_input = jax.random.split(key)
    params = init_params(k_param, cin=4, c1=8, c2=16, cdec=16, n_classes=3)

    # Deterministic small NCHW input, matching the PyTorch module's forward.
    x = jax.random.normal(k_input, (2, 4, 16, 16), jnp.float32)

    out = jax.block_until_ready(mmit_forward(params, x))
    assert out.shape == (2, 3, 16, 16), out.shape
    assert bool(jnp.all(jnp.isfinite(out)))

    ref = jax.block_until_ready(reference_forward(params, x))
    max_err = float(jnp.max(jnp.abs(out - ref)))
    # bf16 MXU operands with f32 accumulation vs. an f32 XLA reference:
    # expected ~1e-2-level absolute error on O(1) outputs through 4 layers.
    assert max_err < 5e-2, f"kernel mismatch vs reference: max |err| = {max_err}"

    print("KERNEL_OK")
</pallas_src>

<mosaic_0001>
module attributes {stable_mosaic.version = 11 : i64} {
  func.func @_mmit_fused_kernel(%arg0: i32, %arg1: memref<1x8x256xf32, #tpu.memory_space<vmem>>, %arg2: memref<9x256xf32, #tpu.memory_space<vmem>>, %arg3: memref<1x256xf32, #tpu.memory_space<vmem>>, %arg4: memref<1x256xf32, #tpu.memory_space<vmem>>, %arg5: memref<8x72xbf16, #tpu.memory_space<vmem>>, %arg6: memref<8x1xf32, #tpu.memory_space<vmem>>, %arg7: memref<16x72xbf16, #tpu.memory_space<vmem>>, %arg8: memref<16x1xf32, #tpu.memory_space<vmem>>, %arg9: memref<16x216xbf16, #tpu.memory_space<vmem>>, %arg10: memref<16x1xf32, #tpu.memory_space<vmem>>, %arg11: memref<3x16xf32, #tpu.memory_space<vmem>>, %arg12: memref<3x1xf32, #tpu.memory_space<vmem>>, %arg13: memref<1x3x256xf32, #tpu.memory_space<vmem>>, %arg14: memref<216x256xbf16, #tpu.memory_space<vmem>>) attributes {dimension_semantics = [#tpu.dimension_semantics<parallel>], iteration_bounds = array<i64: 2>, scalar_prefetch = 0 : i64, scratch_operands = 1 : i64, tpu.core_type = #tpu.core_type<tc>, window_params = [{transform_indices = @transform_0, window_bounds = array<i64: 1, 8, 256>}, {pipeline_mode = #tpu.pipeline_mode<synchronous>, transform_indices = @transform_1, window_bounds = array<i64: 9, 256>}, {pipeline_mode = #tpu.pipeline_mode<synchronous>, transform_indices = @transform_2, window_bounds = array<i64: 1, 256>}, {pipeline_mode = #tpu.pipeline_mode<synchronous>, transform_indices = @transform_3, window_bounds = array<i64: 1, 256>}, {pipeline_mode = #tpu.pipeline_mode<synchronous>, transform_indices = @transform_4, window_bounds = array<i64: 8, 72>}, {pipeline_mode = #tpu.pipeline_mode<synchronous>, transform_indices = @transform_5, window_bounds = array<i64: 8, 1>}, {pipeline_mode = #tpu.pipeline_mode<synchronous>, transform_indices = @transform_6, window_bounds = array<i64: 16, 72>}, {pipeline_mode = #tpu.pipeline_mode<synchronous>, transform_indices = @transform_7, window_bounds = array<i64: 16, 1>}, {pipeline_mode = #tpu.pipeline_mode<synchronous>, transform_indices = @transform_8, window_bounds = array<i64: 16, 216>}, {pipeline_mode = #tpu.pipeline_mode<synchronous>, transform_indices = @transform_9, window_bounds = array<i64: 16, 1>}, {pipeline_mode = #tpu.pipeline_mode<synchronous>, transform_indices = @transform_10, window_bounds = array<i64: 3, 16>}, {pipeline_mode = #tpu.pipeline_mode<synchronous>, transform_indices = @transform_11, window_bounds = array<i64: 3, 1>}, {transform_indices = @transform_12, window_bounds = array<i64: 1, 3, 256>}]} {
    %c0 = arith.constant 0 : index
    %c0_0 = arith.constant 0 : index
    %0 = vector.load %arg2[%c0, %c0_0] : memref<9x256xf32, #tpu.memory_space<vmem>>, vector<9x256xf32>
    %1 = vector.extract_strided_slice %0 {offsets = [0, 0], sizes = [1, 256], strides = [1, 1]} : vector<9x256xf32> to vector<1x256xf32>
    %2 = vector.extract_strided_slice %0 {offsets = [1, 0], sizes = [1, 256], strides = [1, 1]} : vector<9x256xf32> to vector<1x256xf32>
    %3 = vector.extract_strided_slice %0 {offsets = [2, 0], sizes = [1, 256], strides = [1, 1]} : vector<9x256xf32> to vector<1x256xf32>
    %4 = vector.extract_strided_slice %0 {offsets = [3, 0], sizes = [1, 256], strides = [1, 1]} : vector<9x256xf32> to vector<1x256xf32>
    %5 = vector.extract_strided_slice %0 {offsets = [5, 0], sizes = [1, 256], strides = [1, 1]} : vector<9x256xf32> to vector<1x256xf32>
    %6 = vector.extract_strided_slice %0 {offsets = [6, 0], sizes = [1, 256], strides = [1, 1]} : vector<9x256xf32> to vector<1x256xf32>
    %7 = vector.extract_strided_slice %0 {offsets = [7, 0], sizes = [1, 256], strides = [1, 1]} : vector<9x256xf32> to vector<1x256xf32>
    %8 = vector.extract_strided_slice %0 {offsets = [8, 0], sizes = [1, 256], strides = [1, 1]} : vector<9x256xf32> to vector<1x256xf32>
    %c0_1 = arith.constant 0 : index
    %c0_2 = arith.constant 0 : index
    %9 = vector.load %arg3[%c0_1, %c0_2] : memref<1x256xf32, #tpu.memory_space<vmem>>, vector<1x256xf32>
    %c0_3 = arith.constant 0 : index
    %c0_4 = arith.constant 0 : index
    %10 = vector.load %arg4[%c0_3, %c0_4] : memref<1x256xf32, #tpu.memory_space<vmem>>, vector<1x256xf32>
    %c0_5 = arith.constant 0 : index
    %c0_6 = arith.constant 0 : index
    %11 = vector.load %arg6[%c0_5, %c0_6] : memref<8x1xf32, #tpu.memory_space<vmem>>, vector<8x1xf32>
    %c0_7 = arith.constant 0 : index
    %c0_8 = arith.constant 0 : index
    %12 = vector.load %arg8[%c0_7, %c0_8] : memref<16x1xf32, #tpu.memory_space<vmem>>, vector<16x1xf32>
    %c0_9 = arith.constant 0 : index
    %c0_10 = arith.constant 0 : index
    %13 = vector.load %arg10[%c0_9, %c0_10] : memref<16x1xf32, #tpu.memory_space<vmem>>, vector<16x1xf32>
    %c0_11 = arith.constant 0 : index
    %c0_12 = arith.constant 0 : index
    %14 = vector.load %arg12[%c0_11, %c0_12] : memref<3x1xf32, #tpu.memory_space<vmem>>, vector<3x1xf32>
    %c0_13 = arith.constant 0 : index
    %c0_14 = arith.constant 0 : index
    %c0_15 = arith.constant 0 : index
    %15 = vector.load %arg1[%c0_13, %c0_14, %c0_15] : memref<1x8x256xf32, #tpu.memory_space<vmem>>, vector<1x8x256xf32>
    %16 = vector.shape_cast %15 : vector<1x8x256xf32> to vector<8x256xf32>
    %c17_i32 = arith.constant 17 : i32
    %17 = tpu.dynamic_rotate %16 by %c17_i32 dim 1 : vector<8x256xf32>, i32 -> vector<8x256xf32>
    %18 = vector.broadcast %1 : vector<1x256xf32> to vector<8x256xf32>
    %19 = arith.mulf %17, %18 : vector<8x256xf32>
    %20 = arith.truncf %19 : vector<8x256xf32> to vector<8x256xbf16>
    %c0_16 = arith.constant 0 : index
    %c0_17 = arith.constant 0 : index
    %21 = vector.load %arg14[%c0_16, %c0_17] : memref<216x256xbf16, #tpu.memory_space<vmem>>, vector<8x256xbf16>
    tpu.vector_store %arg14[%c0_16, %c0_17], %20 {strides = array<i32>} : memref<216x256xbf16, #tpu.memory_space<vmem>>, vector<8x256xbf16>,
    %c16_i32 = arith.constant 16 : i32
    %22 = tpu.dynamic_rotate %16 by %c16_i32 dim 1 : vector<8x256xf32>, i32 -> vector<8x256xf32>
    %23 = vector.broadcast %2 : vector<1x256xf32> to vector<8x256xf32>
    %24 = arith.mulf %22, %23 : vector<8x256xf32>
    %25 = arith.truncf %24 : vector<8x256xf32> to vector<8x256xbf16>
    %c8 = arith.constant 8 : index
    %c0_18 = arith.constant 0 : index
    %26 = vector.load %arg14[%c8, %c0_18] : memref<216x256xbf16, #tpu.memory_space<vmem>>, vector<8x256xbf16>
    tpu.vector_store %arg14[%c8, %c0_18], %25 {strides = array<i32>} : memref<216x256xbf16, #tpu.memory_space<vmem>>, vector<8x256xbf16>,
    %c15_i32 = arith.constant 15 : i32
    %27 = tpu.dynamic_rotate %16 by %c15_i32 dim 1 : vector<8x256xf32>, i32 -> vector<8x256xf32>
    %28 = vector.broadcast %3 : vector<1x256xf32> to vector<8x256xf32>
    %29 = arith.mulf %27, %28 : vector<8x256xf32>
    %30 = arith.truncf %29 : vector<8x256xf32> to vector<8x256xbf16>
    %c16 = arith.constant 16 : index
    %c0_19 = arith.constant 0 : index
    %31 = vector.load %arg14[%c16, %c0_19] : memref<216x256xbf16, #tpu.memory_space<vmem>>, vector<8x256xbf16>
    tpu.vector_store %arg14[%c16, %c0_19], %30 {strides = array<i32>} : memref<216x256xbf16, #tpu.memory_space<vmem>>, vector<8x256xbf16>,
    %c1_i32 = arith.constant 1 : i32
    %32 = tpu.dynamic_rotate %16 by %c1_i32 dim 1 : vector<8x256xf32>, i32 -> vector<8x256xf32>
    %33 = vector.broadcast %4 : vector<1x256xf32> to vector<8x256xf32>
    %34 = arith.mulf %32, %33 : vector<8x256xf32>
    %35 = arith.truncf %34 : vector<8x256xf32> to vector<8x256xbf16>
    %c24 = arith.constant 24 : index
    %c0_20 = arith.constant 0 : index
    %36 = vector.load %arg14[%c24, %c0_20] : memref<216x256xbf16, #tpu.memory_space<vmem>>, vector<8x256xbf16>
    tpu.vector_store %arg14[%c24, %c0_20], %35 {strides = array<i32>} : memref<216x256xbf16, #tpu.memory_space<vmem>>, vector<8x256xbf16>,
    %37 = arith.truncf %16 : vector<8x256xf32> to vector<8x256xbf16>
    %c32 = arith.constant 32 : index
    %c0_21 = arith.constant 0 : index
    %38 = vector.load %arg14[%c32, %c0_21] : memref<216x256xbf16, #tpu.memory_space<vmem>>, vector<8x256xbf16>
    tpu.vector_store %arg14[%c32, %c0_21], %37 {strides = array<i32>} : memref<216x256xbf16, #tpu.memory_space<vmem>>, vector<8x256xbf16>,
    %c255_i32 = arith.constant 255 : i32
    %39 = tpu.dynamic_rotate %16 by %c255_i32 dim 1 : vector<8x256xf32>, i32 -> vector<8x256xf32>
    %40 = vector.broadcast %5 : vector<1x256xf32> to vector<8x256xf32>
    %41 = arith.mulf %39, %40 : vector<8x256xf32>
    %42 = arith.truncf %41 : vector<8x256xf32> to vector<8x256xbf16>
    %c40 = arith.constant 40 : index
    %c0_22 = arith.constant 0 : index
    %43 = vector.load %arg14[%c40, %c0_22] : memref<216x256xbf16, #tpu.memory_space<vmem>>, vector<8x256xbf16>
    tpu.vector_store %arg14[%c40, %c0_22], %42 {strides = array<i32>} : memref<216x256xbf16, #tpu.memory_space<vmem>>, vector<8x256xbf16>,
    %c241_i32 = arith.constant 241 : i32
    %44 = tpu.dynamic_rotate %16 by %c241_i32 dim 1 : vector<8x256xf32>, i32 -> vector<8x256xf32>
    %45 = vector.broadcast %6 : vector<1x256xf32> to vector<8x256xf32>
    %46 = arith.mulf %44, %45 : vector<8x256xf32>
    %47 = arith.truncf %46 : vector<8x256xf32> to vector<8x256xbf16>
    %c48 = arith.constant 48 : index
    %c0_23 = arith.constant 0 : index
    %48 = vector.load %arg14[%c48, %c0_23] : memref<216x256xbf16, #tpu.memory_space<vmem>>, vector<8x256xbf16>
    tpu.vector_store %arg14[%c48, %c0_23], %47 {strides = array<i32>} : memref<216x256xbf16, #tpu.memory_space<vmem>>, vector<8x256xbf16>,
    %c240_i32 = arith.constant 240 : i32
    %49 = tpu.dynamic_rotate %16 by %c240_i32 dim 1 : vector<8x256xf32>, i32 -> vector<8x256xf32>
    %50 = vector.broadcast %7 : vector<1x256xf32> to vector<8x256xf32>
    %51 = arith.mulf %49, %50 : vector<8x256xf32>
    %52 = arith.truncf %51 : vector<8x256xf32> to vector<8x256xbf16>
    %c56 = arith.constant 56 : index
    %c0_24 = arith.constant 0 : index
    %53 = vector.load %arg14[%c56, %c0_24] : memref<216x256xbf16, #tpu.memory_space<vmem>>, vector<8x256xbf16>
    tpu.vector_store %arg14[%c56, %c0_24], %52 {strides = array<i32>} : memref<216x256xbf16, #tpu.memory_space<vmem>>, vector<8x256xbf16>,
    %c239_i32 = arith.constant 239 : i32
    %54 = tpu.dynamic_rotate %16 by %c239_i32 dim 1 : vector<8x256xf32>, i32 -> vector<8x256xf32>
    %55 = vector.broadcast %8 : vector<1x256xf32> to vector<8x256xf32>
    %56 = arith.mulf %54, %55 : vector<8x256xf32>
    %57 = arith.truncf %56 : vector<8x256xf32> to vector<8x256xbf16>
    %c64 = arith.constant 64 : index
    %c0_25 = arith.constant 0 : index
    %58 = vector.load %arg14[%c64, %c0_25] : memref<216x256xbf16, #tpu.memory_space<vmem>>, vector<8x256xbf16>
    tpu.vector_store %arg14[%c64, %c0_25], %57 {strides = array<i32>} : memref<216x256xbf16, #tpu.memory_space<vmem>>, vector<8x256xbf16>,
    %c0_26 = arith.constant 0 : index
    %c0_27 = arith.constant 0 : index
    %59 = vector.load %arg5[%c0_26, %c0_27] : memref<8x72xbf16, #tpu.memory_space<vmem>>, vector<8x72xbf16>
    %c0_28 = arith.constant 0 : index
    %c0_29 = arith.constant 0 : index
    %60 = vector.load %arg14[%c0_28, %c0_29] : memref<216x256xbf16, #tpu.memory_space<vmem>>, vector<72x256xbf16>
    %cst = arith.constant dense<0.000000e+00> : vector<8x256xf32>
    %61 = tpu.matmul %59, %60, %cst {dimension_numbers = #tpu.dot_dimension_numbers<[1], [0], [0], [1], [0, 0, 1, 1], [], []>} : vector<8x72xbf16>, vector<72x256xbf16>, vector<8x256xf32> -> vector<8x256xf32>
    %62 = vector.broadcast %11 : vector<8x1xf32> to vector<8x256xf32>
    %63 = arith.addf %61, %62 : vector<8x256xf32>
    %cst_30 = arith.constant 0.000000e+00 : f32
    %64 = vector.broadcast %cst_30 : f32 to vector<8x256xf32>
    %65 = arith.maximumf %63, %64 : vector<8x256xf32>
    %c17_i32_31 = arith.constant 17 : i32
    %66 = tpu.dynamic_rotate %65 by %c17_i32_31 dim 1 : vector<8x256xf32>, i32 -> vector<8x256xf32>
    %67 = vector.broadcast %1 : vector<1x256xf32> to vector<8x256xf32>
    %68 = arith.mulf %66, %67 : vector<8x256xf32>
    %69 = arith.truncf %68 : vector<8x256xf32> to vector<8x256xbf16>
    %c0_32 = arith.constant 0 : index
    %c0_33 = arith.constant 0 : index
    %70 = vector.load %arg14[%c0_32, %c0_33] : memref<216x256xbf16, #tpu.memory_space<vmem>>, vector<8x256xbf16>
    tpu.vector_store %arg14[%c0_32, %c0_33], %69 {strides = array<i32>} : memref<216x256xbf16, #tpu.memory_space<vmem>>, vector<8x256xbf16>,
    %c16_i32_34 = arith.constant 16 : i32
    %71 = tpu.dynamic_rotate %65 by %c16_i32_34 dim 1 : vector<8x256xf32>, i32 -> vector<8x256xf32>
    %72 = vector.broadcast %2 : vector<1x256xf32> to vector<8x256xf32>
    %73 = arith.mulf %71, %72 : vector<8x256xf32>
    %74 = arith.truncf %73 : vector<8x256xf32> to vector<8x256xbf16>
    %c8_35 = arith.constant 8 : index
    %c0_36 = arith.constant 0 : index
    %75 = vector.load %arg14[%c8_35, %c0_36] : memref<216x256xbf16, #tpu.memory_space<vmem>>, vector<8x256xbf16>
    tpu.vector_store %arg14[%c8_35, %c0_36], %74 {strides = array<i32>} : memref<216x256xbf16, #tpu.memory_space<vmem>>, vector<8x256xbf16>,
    %c15_i32_37 = arith.constant 15 : i32
    %76 = tpu.dynamic_rotate %65 by %c15_i32_37 dim 1 : vector<8x256xf32>, i32 -> vector<8x256xf32>
    %77 = vector.broadcast %3 : vector<1x256xf32> to vector<8x256xf32>
    %78 = arith.mulf %76, %77 : vector<8x256xf32>
    %79 = arith.truncf %78 : vector<8x256xf32> to vector<8x256xbf16>
    %c16_38 = arith.constant 16 : index
    %c0_39 = arith.constant 0 : index
    %80 = vector.load %arg14[%c16_38, %c0_39] : memref<216x256xbf16, #tpu.memory_space<vmem>>, vector<8x256xbf16>
    tpu.vector_store %arg14[%c16_38, %c0_39], %79 {strides = array<i32>} : memref<216x256xbf16, #tpu.memory_space<vmem>>, vector<8x256xbf16>,
    %c1_i32_40 = arith.constant 1 : i32
    %81 = tpu.dynamic_rotate %65 by %c1_i32_40 dim 1 : vector<8x256xf32>, i32 -> vector<8x256xf32>
    %82 = vector.broadcast %4 : vector<1x256xf32> to vector<8x256xf32>
    %83 = arith.mulf %81, %82 : vector<8x256xf32>
    %84 = arith.truncf %83 : vector<8x256xf32> to vector<8x256xbf16>
    %c24_41 = arith.constant 24 : index
    %c0_42 = arith.constant 0 : index
    %85 = vector.load %arg14[%c24_41, %c0_42] : memref<216x256xbf16, #tpu.memory_space<vmem>>, vector<8x256xbf16>
    tpu.vector_store %arg14[%c24_41, %c0_42], %84 {strides = array<i32>} : memref<216x256xbf16, #tpu.memory_space<vmem>>, vector<8x256xbf16>,
    %86 = arith.truncf %65 : vector<8x256xf32> to vector<8x256xbf16>
    %c32_43 = arith.constant 32 : index
    %c0_44 = arith.constant 0 : index
    %87 = vector.load %arg14[%c32_43, %c0_44] : memref<216x256xbf16, #tpu.memory_space<vmem>>, vector<8x256xbf16>
    tpu.vector_store %arg14[%c32_43, %c0_44], %86 {strides = array<i32>} : memref<216x256xbf16, #tpu.memory_space<vmem>>, vector<8x256xbf16>,
    %c255_i32_45 = arith.constant 255 : i32
    %88 = tpu.dynamic_rotate %65 by %c255_i32_45 dim 1 : vector<8x256xf32>, i32 -> vector<8x256xf32>
    %89 = vector.broadcast %5 : vector<1x256xf32> to vector<8x256xf32>
    %90 = arith.mulf %88, %89 : vector<8x256xf32>
    %91 = arith.truncf %90 : vector<8x256xf32> to vector<8x256xbf16>
    %c40_46 = arith.constant 40 : index
    %c0_47 = arith.constant 0 : index
    %92 = vector.load %arg14[%c40_46, %c0_47] : memref<216x256xbf16, #tpu.memory_space<vmem>>, vector<8x256xbf16>
    tpu.vector_store %arg14[%c40_46, %c0_47], %91 {strides = array<i32>} : memref<216x256xbf16, #tpu.memory_space<vmem>>, vector<8x256xbf16>,
    %c241_i32_48 = arith.constant 241 : i32
    %93 = tpu.dynamic_rotate %65 by %c241_i32_48 dim 1 : vector<8x256xf32>, i32 -> vector<8x256xf32>
    %94 = vector.broadcast %6 : vector<1x256xf32> to vector<8x256xf32>
    %95 = arith.mulf %93, %94 : vector<8x256xf32>
    %96 = arith.truncf %95 : vector<8x256xf32> to vector<8x256xbf16>
    %c48_49 = arith.constant 48 : index
    %c0_50 = arith.constant 0 : index
    %97 = vector.load %arg14[%c48_49, %c0_50] : memref<216x256xbf16, #tpu.memory_space<vmem>>, vector<8x256xbf16>
    tpu.vector_store %arg14[%c48_49, %c0_50], %96 {strides = array<i32>} : memref<216x256xbf16, #tpu.memory_space<vmem>>, vector<8x256xbf16>,
    %c240_i32_51 = arith.constant 240 : i32
    %98 = tpu.dynamic_rotate %65 by %c240_i32_51 dim 1 : vector<8x256xf32>, i32 -> vector<8x256xf32>
    %99 = vector.broadcast %7 : vector<1x256xf32> to vector<8x256xf32>
    %100 = arith.mulf %98, %99 : vector<8x256xf32>
    %101 = arith.truncf %100 : vector<8x256xf32> to vector<8x256xbf16>
    %c56_52 = arith.constant 56 : index
    %c0_53 = arith.constant 0 : index
    %102 = vector.load %arg14[%c56_52, %c0_53] : memref<216x256xbf16, #tpu.memory_space<vmem>>, vector<8x256xbf16>
    tpu.vector_store %arg14[%c56_52, %c0_53], %101 {strides = array<i32>} : memref<216x256xbf16, #tpu.memory_space<vmem>>, vector<8x256xbf16>,
    %c239_i32_54 = arith.constant 239 : i32
    %103 = tpu.dynamic_rotate %65 by %c239_i32_54 dim 1 : vector<8x256xf32>, i32 -> vector<8x256xf32>
    %104 = vector.broadcast %8 : vector<1x256xf32> to vector<8x256xf32>
    %105 = arith.mulf %103, %104 : vector<8x256xf32>
    %106 = arith.truncf %105 : vector<8x256xf32> to vector<8x256xbf16>
    %c64_55 = arith.constant 64 : index
    %c0_56 = arith.constant 0 : index
    %107 = vector.load %arg14[%c64_55, %c0_56] : memref<216x256xbf16, #tpu.memory_space<vmem>>, vector<8x256xbf16>
    tpu.vector_store %arg14[%c64_55, %c0_56], %106 {strides = array<i32>} : memref<216x256xbf16, #tpu.memory_space<vmem>>, vector<8x256xbf16>,
    %c0_57 = arith.constant 0 : index
    %c0_58 = arith.constant 0 : index
    %108 = vector.load %arg7[%c0_57, %c0_58] : memref<16x72xbf16, #tpu.memory_space<vmem>>, vector<16x72xbf16>
    %c0_59 = arith.constant 0 : index
    %c0_60 = arith.constant 0 : index
    %109 = vector.load %arg14[%c0_59, %c0_60] : memref<216x256xbf16, #tpu.memory_space<vmem>>, vector<72x256xbf16>
    %cst_61 = arith.constant dense<0.000000e+00> : vector<16x256xf32>
    %110 = tpu.matmul %108, %109, %cst_61 {dimension_numbers = #tpu.dot_dimension_numbers<[1], [0], [0], [1], [0, 0, 1, 1], [], []>} : vector<16x72xbf16>, vector<72x256xbf16>, vector<16x256xf32> -> vector<16x256xf32>
    %111 = vector.broadcast %12 : vector<16x1xf32> to vector<16x256xf32>
    %112 = arith.addf %110, %111 : vector<16x256xf32>
    %cst_62 = arith.constant 0.000000e+00 : f32
    %113 = vector.broadcast %cst_62 : f32 to vector<16x256xf32>
    %114 = arith.maximumf %112, %113 : vector<16x256xf32>
    %c1_i32_63 = arith.constant 1 : i32
    %115 = tpu.dynamic_rotate %114 by %c1_i32_63 dim 1 : vector<16x256xf32>, i32 -> vector<16x256xf32>
    %116 = arith.subf %115, %114 : vector<16x256xf32>
    %117 = vector.broadcast %9 : vector<1x256xf32> to vector<16x256xf32>
    %118 = arith.mulf %117, %116 : vector<16x256xf32>
    %119 = arith.addf %114, %118 : vector<16x256xf32>
    %c16_i32_64 = arith.constant 16 : i32
    %120 = tpu.dynamic_rotate %119 by %c16_i32_64 dim 1 : vector<16x256xf32>, i32 -> vector<16x256xf32>
    %121 = arith.subf %120, %119 : vector<16x256xf32>
    %122 = vector.broadcast %10 : vector<1x256xf32> to vector<16x256xf32>
    %123 = arith.mulf %122, %121 : vector<16x256xf32>
    %124 = arith.addf %119, %123 : vector<16x256xf32>
    %c17_i32_65 = arith.constant 17 : i32
    %125 = tpu.dynamic_rotate %124 by %c17_i32_65 dim 1 : vector<16x256xf32>, i32 -> vector<16x256xf32>
    %126 = vector.broadcast %1 : vector<1x256xf32> to vector<16x256xf32>
    %127 = arith.mulf %125, %126 : vector<16x256xf32>
    %128 = arith.truncf %127 : vector<16x256xf32> to vector<16x256xbf16>
    %c72 = arith.constant 72 : index
    %c0_66 = arith.constant 0 : index
    %129 = vector.load %arg14[%c72, %c0_66] : memref<216x256xbf16, #tpu.memory_space<vmem>>, vector<16x256xbf16>
    tpu.vector_store %arg14[%c72, %c0_66], %128 {strides = array<i32>} : memref<216x256xbf16, #tpu.memory_space<vmem>>, vector<16x256xbf16>,
    %c16_i32_67 = arith.constant 16 : i32
    %130 = tpu.dynamic_rotate %124 by %c16_i32_67 dim 1 : vector<16x256xf32>, i32 -> vector<16x256xf32>
    %131 = vector.broadcast %2 : vector<1x256xf32> to vector<16x256xf32>
    %132 = arith.mulf %130, %131 : vector<16x256xf32>
    %133 = arith.truncf %132 : vector<16x256xf32> to vector<16x256xbf16>
    %c88 = arith.constant 88 : index
    %c0_68 = arith.constant 0 : index
    %134 = vector.load %arg14[%c88, %c0_68] : memref<216x256xbf16, #tpu.memory_space<vmem>>, vector<16x256xbf16>
    tpu.vector_store %arg14[%c88, %c0_68], %133 {strides = array<i32>} : memref<216x256xbf16, #tpu.memory_space<vmem>>, vector<16x256xbf16>,
    %c15_i32_69 = arith.constant 15 : i32
    %135 = tpu.dynamic_rotate %124 by %c15_i32_69 dim 1 : vector<16x256xf32>, i32 -> vector<16x256xf32>
    %136 = vector.broadcast %3 : vector<1x256xf32> to vector<16x256xf32>
    %137 = arith.mulf %135, %136 : vector<16x256xf32>
    %138 = arith.truncf %137 : vector<16x256xf32> to vector<16x256xbf16>
    %c104 = arith.constant 104 : index
    %c0_70 = arith.constant 0 : index
    %139 = vector.load %arg14[%c104, %c0_70] : memref<216x256xbf16, #tpu.memory_space<vmem>>, vector<16x256xbf16>
    tpu.vector_store %arg14[%c104, %c0_70], %138 {strides = array<i32>} : memref<216x256xbf16, #tpu.memory_space<vmem>>, vector<16x256xbf16>,
    %c1_i32_71 = arith.constant 1 : i32
    %140 = tpu.dynamic_rotate %124 by %c1_i32_71 dim 1 : vector<16x256xf32>, i32 -> vector<16x256xf32>
    %141 = vector.broadcast %4 : vector<1x256xf32> to vector<16x256xf32>
    %142 = arith.mulf %140, %141 : vector<16x256xf32>
    %143 = arith.truncf %142 : vector<16x256xf32> to vector<16x256xbf16>
    %c120 = arith.constant 120 : index
    %c0_72 = arith.constant 0 : index
    %144 = vector.load %arg14[%c120, %c0_72] : memref<216x256xbf16, #tpu.memory_space<vmem>>, vector<16x256xbf16>
    tpu.vector_store %arg14[%c120, %c0_72], %143 {strides = array<i32>} : memref<216x256xbf16, #tpu.memory_space<vmem>>, vector<16x256xbf16>,
    %145 = arith.truncf %124 : vector<16x256xf32> to vector<16x256xbf16>
    %c136 = arith.constant 136 : index
    %c0_73 = arith.constant 0 : index
    %146 = vector.load %arg14[%c136, %c0_73] : memref<216x256xbf16, #tpu.memory_space<vmem>>, vector<16x256xbf16>
    tpu.vector_store %arg14[%c136, %c0_73], %145 {strides = array<i32>} : memref<216x256xbf16, #tpu.memory_space<vmem>>, vector<16x256xbf16>,
    %c255_i32_74 = arith.constant 255 : i32
    %147 = tpu.dynamic_rotate %124 by %c255_i32_74 dim 1 : vector<16x256xf32>, i32 -> vector<16x256xf32>
    %148 = vector.broadcast %5 : vector<1x256xf32> to vector<16x256xf32>
    %149 = arith.mulf %147, %148 : vector<16x256xf32>
    %150 = arith.truncf %149 : vector<16x256xf32> to vector<16x256xbf16>
    %c152 = arith.constant 152 : index
    %c0_75 = arith.constant 0 : index
    %151 = vector.load %arg14[%c152, %c0_75] : memref<216x256xbf16, #tpu.memory_space<vmem>>, vector<16x256xbf16>
    tpu.vector_store %arg14[%c152, %c0_75], %150 {strides = array<i32>} : memref<216x256xbf16, #tpu.memory_space<vmem>>, vector<16x256xbf16>,
    %c241_i32_76 = arith.constant 241 : i32
    %152 = tpu.dynamic_rotate %124 by %c241_i32_76 dim 1 : vector<16x256xf32>, i32 -> vector<16x256xf32>
    %153 = vector.broadcast %6 : vector<1x256xf32> to vector<16x256xf32>
    %154 = arith.mulf %152, %153 : vector<16x256xf32>
    %155 = arith.truncf %154 : vector<16x256xf32> to vector<16x256xbf16>
    %c168 = arith.constant 168 : index
    %c0_77 = arith.constant 0 : index
    %156 = vector.load %arg14[%c168, %c0_77] : memref<216x256xbf16, #tpu.memory_space<vmem>>, vector<16x256xbf16>
    tpu.vector_store %arg14[%c168, %c0_77], %155 {strides = array<i32>} : memref<216x256xbf16, #tpu.memory_space<vmem>>, vector<16x256xbf16>,
    %c240_i32_78 = arith.constant 240 : i32
    %157 = tpu.dynamic_rotate %124 by %c240_i32_78 dim 1 : vector<16x256xf32>, i32 -> vector<16x256xf32>
    %158 = vector.broadcast %7 : vector<1x256xf32> to vector<16x256xf32>
    %159 = arith.mulf %157, %158 : vector<16x256xf32>
    %160 = arith.truncf %159 : vector<16x256xf32> to vector<16x256xbf16>
    %c184 = arith.constant 184 : index
    %c0_79 = arith.constant 0 : index
    %161 = vector.load %arg14[%c184, %c0_79] : memref<216x256xbf16, #tpu.memory_space<vmem>>, vector<16x256xbf16>
    tpu.vector_store %arg14[%c184, %c0_79], %160 {strides = array<i32>} : memref<216x256xbf16, #tpu.memory_space<vmem>>, vector<16x256xbf16>,
    %c239_i32_80 = arith.constant 239 : i32
    %162 = tpu.dynamic_rotate %124 by %c239_i32_80 dim 1 : vector<16x256xf32>, i32 -> vector<16x256xf32>
    %163 = vector.broadcast %8 : vector<1x256xf32> to vector<16x256xf32>
    %164 = arith.mulf %162, %163 : vector<16x256xf32>
    %165 = arith.truncf %164 : vector<16x256xf32> to vector<16x256xbf16>
    %c200 = arith.constant 200 : index
    %c0_81 = arith.constant 0 : index
    %166 = vector.load %arg14[%c200, %c0_81] : memref<216x256xbf16, #tpu.memory_space<vmem>>, vector<16x256xbf16>
    tpu.vector_store %arg14[%c200, %c0_81], %165 {strides = array<i32>} : memref<216x256xbf16, #tpu.memory_space<vmem>>, vector<16x256xbf16>,
    %c0_82 = arith.constant 0 : index
    %c0_83 = arith.constant 0 : index
    %167 = vector.load %arg9[%c0_82, %c0_83] : memref<16x216xbf16, #tpu.memory_space<vmem>>, vector<16x216xbf16>
    %c0_84 = arith.constant 0 : index
    %c0_85 = arith.constant 0 : index
    %168 = vector.load %arg14[%c0_84, %c0_85] : memref<216x256xbf16, #tpu.memory_space<vmem>>, vector<216x256xbf16>
    %cst_86 = arith.constant dense<0.000000e+00> : vector<16x256xf32>
    %169 = tpu.matmul %167, %168, %cst_86 {dimension_numbers = #tpu.dot_dimension_numbers<[1], [0], [0], [1], [0, 0, 1, 1], [], []>} : vector<16x216xbf16>, vector<216x256xbf16>, vector<16x256xf32> -> vector<16x256xf32>
    %170 = vector.broadcast %13 : vector<16x1xf32> to vector<16x256xf32>
    %171 = arith.addf %169, %170 : vector<16x256xf32>
    %cst_87 = arith.constant 0.000000e+00 : f32
    %172 = vector.broadcast %cst_87 : f32 to vector<16x256xf32>
    %173 = arith.maximumf %171, %172 : vector<16x256xf32>
    %c0_88 = arith.constant 0 : index
    %c0_89 = arith.constant 0 : index
    %174 = vector.load %arg11[%c0_88, %c0_89] : memref<3x16xf32, #tpu.memory_space<vmem>>, vector<3x16xf32>
    %cst_90 = arith.constant dense<0.000000e+00> : vector<3x256xf32>
    %175 = tpu.matmul %174, %173, %cst_90 {dimension_numbers = #tpu.dot_dimension_numbers<[1], [0], [0], [1], [0, 0, 1, 1], [], []>} : vector<3x16xf32>, vector<16x256xf32>, vector<3x256xf32> -> vector<3x256xf32>
    %176 = vector.broadcast %14 : vector<3x1xf32> to vector<3x256xf32>
    %177 = arith.addf %175, %176 : vector<3x256xf32>
    %c0_91 = arith.constant 0 : index
    %c0_92 = arith.constant 0 : index
    %c0_93 = arith.constant 0 : index
    %178 = vector.load %arg13[%c0_91, %c0_92, %c0_93] : memref<1x3x256xf32, #tpu.memory_space<vmem>>, vector<1x3x256xf32>
    %179 = vector.shape_cast %178 : vector<1x3x256xf32> to vector<3x256xf32>
    %180 = vector.shape_cast %177 : vector<3x256xf32> to vector<1x3x256xf32>
    tpu.vector_store %arg13[%c0_91, %c0_92, %c0_93], %180 {strides = array<i32>} : memref<1x3x256xf32, #tpu.memory_space<vmem>>, vector<1x3x256xf32>,
    return
  }
  func.func @transform_0(%arg0: i32) -> (i32, i32, i32) {
    %c0_i32 = arith.constant 0 : i32
    %c0_i32_0 = arith.constant 0 : i32
    %c0_i32_1 = arith.constant 0 : i32
    return %arg0, %c0_i32, %c0_i32_0 : i32, i32, i32
  }
  func.func @transform_1(%arg0: i32) -> (i32, i32) {
    %c0_i32 = arith.constant 0 : i32
    %c0_i32_0 = arith.constant 0 : i32
    %c0_i32_1 = arith.constant 0 : i32
    return %c0_i32, %c0_i32_0 : i32, i32
  }
  func.func @transform_2(%arg0: i32) -> (i32, i32) {
    %c0_i32 = arith.constant 0 : i32
    %c0_i32_0 = arith.constant 0 : i32
    %c0_i32_1 = arith.constant 0 : i32
    return %c0_i32, %c0_i32_0 : i32, i32
  }
  func.func @transform_3(%arg0: i32) -> (i32, i32) {
    %c0_i32 = arith.constant 0 : i32
    %c0_i32_0 = arith.constant 0 : i32
    %c0_i32_1 = arith.constant 0 : i32
    return %c0_i32, %c0_i32_0 : i32, i32
  }
  func.func @transform_4(%arg0: i32) -> (i32, i32) {
    %c0_i32 = arith.constant 0 : i32
    %c0_i32_0 = arith.constant 0 : i32
    %c0_i32_1 = arith.constant 0 : i32
    return %c0_i32, %c0_i32_0 : i32, i32
  }
  func.func @transform_5(%arg0: i32) -> (i32, i32) {
    %c0_i32 = arith.constant 0 : i32
    %c0_i32_0 = arith.constant 0 : i32
    %c0_i32_1 = arith.constant 0 : i32
    return %c0_i32, %c0_i32_0 : i32, i32
  }
  func.func @transform_6(%arg0: i32) -> (i32, i32) {
    %c0_i32 = arith.constant 0 : i32
    %c0_i32_0 = arith.constant 0 : i32
    %c0_i32_1 = arith.constant 0 : i32
    return %c0_i32, %c0_i32_0 : i32, i32
  }
  func.func @transform_7(%arg0: i32) -> (i32, i32) {
    %c0_i32 = arith.constant 0 : i32
    %c0_i32_0 = arith.constant 0 : i32
    %c0_i32_1 = arith.constant 0 : i32
    return %c0_i32, %c0_i32_0 : i32, i32
  }
  func.func @transform_8(%arg0: i32) -> (i32, i32) {
    %c0_i32 = arith.constant 0 : i32
    %c0_i32_0 = arith.constant 0 : i32
    %c0_i32_1 = arith.constant 0 : i32
    return %c0_i32, %c0_i32_0 : i32, i32
  }
  func.func @transform_9(%arg0: i32) -> (i32, i32) {
    %c0_i32 = arith.constant 0 : i32
    %c0_i32_0 = arith.constant 0 : i32
    %c0_i32_1 = arith.constant 0 : i32
    return %c0_i32, %c0_i32_0 : i32, i32
  }
  func.func @transform_10(%arg0: i32) -> (i32, i32) {
    %c0_i32 = arith.constant 0 : i32
    %c0_i32_0 = arith.constant 0 : i32
    %c0_i32_1 = arith.constant 0 : i32
    return %c0_i32, %c0_i32_0 : i32, i32
  }
  func.func @transform_11(%arg0: i32) -> (i32, i32) {
    %c0_i32 = arith.constant 0 : i32
    %c0_i32_0 = arith.constant 0 : i32
    %c0_i32_1 = arith.constant 0 : i32
    return %c0_i32, %c0_i32_0 : i32, i32
  }
  func.func @transform_12(%arg0: i32) -> (i32, i32, i32) {
    %c0_i32 = arith.constant 0 : i32
    %c0_i32_0 = arith.constant 0 : i32
    %c0_i32_1 = arith.constant 0 : i32
    return %arg0, %c0_i32, %c0_i32_0 : i32, i32, i32
  }
}

</mosaic_0001>

<llo_original>
// kernel: mmit_forward_fused.1
$region0: #{mmit_forward_fused.1}
  #allocation0 [shape = 'u32[]', space=smem, size = 0x4, offset = 0x4, fixed_abs, tag = 'smem constant byte address 0x4 - core index']
  #allocation1 [shape = 'u32[72,128]{1,0:T(1,128)}', space=vmem, size = 0x9000, scoped, tag = 'internal scratch']
  #allocation2 [shape = 'bf16[216,256]{1,0:T(8,128)(2,1)}', space=vmem, size = 0x1b000, scoped, tag = 'scratch operand']
  %s0 = inlined_call_operand.vmem [shape: f32[2,8,256], index: 0, kind: input, shape index: {}]
  %s1 = inlined_call_operand.vmem [shape: f32[9,256], index: 1, kind: input, shape index: {}]
  %s2 = inlined_call_operand.vmem [shape: f32[1,256], index: 2, kind: input, shape index: {}]
  %s3 = inlined_call_operand.vmem [shape: f32[1,256], index: 3, kind: input, shape index: {}]
  %s4 = inlined_call_operand.vmem [shape: bf16[8,72], index: 4, kind: input, shape index: {}]
  %s5 = inlined_call_operand.vmem [shape: f32[8,1], index: 5, kind: input, shape index: {}]
  %s6 = inlined_call_operand.vmem [shape: bf16[16,72], index: 6, kind: input, shape index: {}]
  %s7 = inlined_call_operand.vmem [shape: f32[16,1], index: 7, kind: input, shape index: {}]
  %s8 = inlined_call_operand.vmem [shape: bf16[16,216], index: 8, kind: input, shape index: {}]
  %s9 = inlined_call_operand.vmem [shape: f32[16,1], index: 9, kind: input, shape index: {}]
  %s10 = inlined_call_operand.vmem [shape: f32[3,16], index: 10, kind: input, shape index: {}]
  %s11 = inlined_call_operand.vmem [shape: f32[3,1], index: 11, kind: input, shape index: {}]
  %s12 = inlined_call_operand.vmem [shape: f32[2,3,256], index: 12, kind: output, shape index: {}]
  %s13 = sld [smem:[#allocation0]]
  $region81: #{mmit_forward_fused.1} parent=0
    _
  %s15 = ssub.s32 1, %s13
  %s16 = scalar_select 0, %s15, %s13
  loop: start=0, step=1, limit=4
  $region2: #{mmit_forward_fused.1} parent=0 // loop_pre_header
    _
  $region3: #{mmit_forward_fused.1} parent=0 // loop_header
    %s18 = sphi 0, %s22
    %p19 = scmp.ge.s32.totalorder %s18, 4
    %s28 = sphi 0, %s30
    %s31 = sphi 0, %s28
    %s32 = sphi 0, %s31
    %s48 = sphi 0, %s32
    %s52 = sphi 0, %s52
    %s54 = sphi 0, %s52
    %s55 = sphi 0, %s54
    %s69 = sphi 0, %s55
    %s73 = sphi 0, %s73
    %s75 = sphi 0, %s73
    %s76 = sphi 0, %s75
    %s90 = sphi 0, %s76
    %s94 = sphi 0, %s94
    %s96 = sphi 0, %s94
    %s97 = sphi 0, %s96
    %s111 = sphi 0, %s97
    %s115 = sphi 0, %s115
    %s117 = sphi 0, %s115
    %s118 = sphi 0, %s117
    %s132 = sphi 0, %s118
    %s136 = sphi 0, %s136
    %s138 = sphi 0, %s136
    %s139 = sphi 0, %s138
    %s153 = sphi 0, %s139
    %s157 = sphi 0, %s157
    %s159 = sphi 0, %s157
    %s160 = sphi 0, %s159
    %s174 = sphi 0, %s160
    %s178 = sphi 0, %s178
    %s180 = sphi 0, %s178
    %s181 = sphi 0, %s180
    %s195 = sphi 0, %s181
    %s199 = sphi 0, %s199
    %s201 = sphi 0, %s199
    %s202 = sphi 0, %s201
    %s216 = sphi 0, %s202
    %s220 = sphi 0, %s220
    %s222 = sphi 0, %s220
    %s223 = sphi 0, %s222
    %s237 = sphi 0, %s223
    %s241 = sphi 0, %s241
    %s243 = sphi 0, %s241
    %s244 = sphi 0, %s243
    %s258 = sphi 0, %s244
    %s262 = sphi 0, %s262
    %s264 = sphi 0, %s262
    %s265 = sphi 0, %s264
    %s279 = sphi 0, %s265
    %s285 = sphi 0, %s287
    %s288 = sphi 0, %s285
    %s289 = sphi 0, %s288
    %s305 = sphi 0, %s289
  $region4: #{mmit_forward_fused.1} parent=0 // loop_header_branch
    %21 = sbr.rel (%p19) target = $region8
  $region5: #{mmit_forward_fused.1} parent=0 // loop_body
    %s23 = ssub.s32 %s18, 1
    %s24 = ssub.s32 %s18, 2
    %s25 = sadd.s32 %s18, 1
    %s26 = ssub.s32 %s18, %s25
    %p27 = scmp.eq.s32.totalorder %s26, 0
    %s29 = sadd.s32 %s28, 1
    %s30 = scalar_select %p27, %s28, %s29
    %p33 = pneg %p27
    %p34 = scmp.eq.s32.totalorder %s18, 1
    %p35 = por %p33, %p34
    %p36 = scmp.ne.s32.totalorder %s28, %s31
    %p37 = scmp.eq.s32.totalorder %s18, 0
    %p38 = por %p36, %p37
    %p39 = scmp.ne.s32.totalorder %s28, %s31
    %p40 = scmp.eq.s32.totalorder %s23, 1
    %p41 = por %p39, %p40
    %p42 = scmp.ne.s32.totalorder %s31, %s32
    %p43 = scmp.eq.s32.totalorder %s23, 0
    %p44 = por %p42, %p43
    %p45 = scmp.ne.s32.totalorder %s31, %s32
    %p46 = scmp.eq.s32.totalorder %s24, 1
    %p47 = por %p45, %p46
    %p49 = scmp.ne.s32.totalorder %s32, %s48
    %p50 = scmp.eq.s32.totalorder %s24, 0
    %p51 = por %p49, %p50
    %s53 = sadd.s32 %s52, 1
    %p56 = scmp.eq.s32.totalorder %s18, 1
    %p57 = scmp.ne.s32.totalorder %s52, %s54
    %p58 = scmp.eq.s32.totalorder %s18, 0
    %p59 = por %p57, %p58
    %p60 = scmp.ne.s32.totalorder %s52, %s54
    %p61 = scmp.eq.s32.totalorder %s23, 1
    %p62 = por %p60, %p61
    %p63 = scmp.ne.s32.totalorder %s54, %s55
    %p64 = scmp.eq.s32.totalorder %s23, 0
    %p65 = por %p63, %p64
    %p66 = scmp.ne.s32.totalorder %s54, %s55
    %p67 = scmp.eq.s32.totalorder %s24, 1
    %p68 = por %p66, %p67
    %p70 = scmp.ne.s32.totalorder %s55, %s69
    %p71 = scmp.eq.s32.totalorder %s24, 0
    %p72 = por %p70, %p71
    %s74 = sadd.s32 %s73, 1
    %p77 = scmp.eq.s32.totalorder %s18, 1
    %p78 = scmp.ne.s32.totalorder %s73, %s75
    %p79 = scmp.eq.s32.totalorder %s18, 0
    %p80 = por %p78, %p79
    %p81 = scmp.ne.s32.totalorder %s73, %s75
    %p82 = scmp.eq.s32.totalorder %s23, 1
    %p83 = por %p81, %p82
    %p84 = scmp.ne.s32.totalorder %s75, %s76
    %p85 = scmp.eq.s32.totalorder %s23, 0
    %p86 = por %p84, %p85
    %p87 = scmp.ne.s32.totalorder %s75, %s76
    %p88 = scmp.eq.s32.totalorder %s24, 1
    %p89 = por %p87, %p88
    %p91 = scmp.ne.s32.totalorder %s76, %s90
    %p92 = scmp.eq.s32.totalorder %s24, 0
    %p93 = por %p91, %p92
    %s95 = sadd.s32 %s94, 1
    %p98 = scmp.eq.s32.totalorder %s18, 1
    %p99 = scmp.ne.s32.totalorder %s94, %s96
    %p100 = scmp.eq.s32.totalorder %s18, 0
    %p101 = por %p99, %p100
    %p102 = scmp.ne.s32.totalorder %s94, %s96
    %p103 = scmp.eq.s32.totalorder %s23, 1
    %p104 = por %p102, %p103
    %p105 = scmp.ne.s32.totalorder %s96, %s97
    %p106 = scmp.eq.s32.totalorder %s23, 0
    %p107 = por %p105, %p106
    %p108 = scmp.ne.s32.totalorder %s96, %s97
    %p109 = scmp.eq.s32.totalorder %s24, 1
    %p110 = por %p108, %p109
    %p112 = scmp.ne.s32.totalorder %s97, %s111
    %p113 = scmp.eq.s32.totalorder %s24, 0
    %p114 = por %p112, %p113
    %s116 = sadd.s32 %s115, 1
    %p119 = scmp.eq.s32.totalorder %s18, 1
    %p120 = scmp.ne.s32.totalorder %s115, %s117
    %p121 = scmp.eq.s32.totalorder %s18, 0
    %p122 = por %p120, %p121
    %p123 = scmp.ne.s32.totalorder %s115, %s117
    %p124 = scmp.eq.s32.totalorder %s23, 1
    %p125 = por %p123, %p124
    %p126 = scmp.ne.s32.totalorder %s117, %s118
    %p127 = scmp.eq.s32.totalorder %s23, 0
    %p128 = por %p126, %p127
    %p129 = scmp.ne.s32.totalorder %s117, %s118
    %p130 = scmp.eq.s32.totalorder %s24, 1
    %p131 = por %p129, %p130
    %p133 = scmp.ne.s32.totalorder %s118, %s132
    %p134 = scmp.eq.s32.totalorder %s24, 0
    %p135 = por %p133, %p134
    %s137 = sadd.s32 %s136, 1
    %p140 = scmp.eq.s32.totalorder %s18, 1
    %p141 = scmp.ne.s32.totalorder %s136, %s138
    %p142 = scmp.eq.s32.totalorder %s18, 0
    %p143 = por %p141, %p142
    %p144 = scmp.ne.s32.totalorder %s136, %s138
    %p145 = scmp.eq.s32.totalorder %s23, 1
    %p146 = por %p144, %p145
    %p147 = scmp.ne.s32.totalorder %s138, %s139
    %p148 = scmp.eq.s32.totalorder %s23, 0
    %p149 = por %p147, %p148
    %p150 = scmp.ne.s32.totalorder %s138, %s139
    %p151 = scmp.eq.s32.totalorder %s24, 1
    %p152 = por %p150, %p151
    %p154 = scmp.ne.s32.totalorder %s139, %s153
    %p155 = scmp.eq.s32.totalorder %s24, 0
    %p156 = por %p154, %p155
    %s158 = sadd.s32 %s157, 1
    %p161 = scmp.eq.s32.totalorder %s18, 1
    %p162 = scmp.ne.s32.totalorder %s157, %s159
    %p163 = scmp.eq.s32.totalorder %s18, 0
    %p164 = por %p162, %p163
    %p165 = scmp.ne.s32.totalorder %s157, %s159
    %p166 = scmp.eq.s32.totalorder %s23, 1
    %p167 = por %p165, %p166
    %p168 = scmp.ne.s32.totalorder %s159, %s160
    %p169 = scmp.eq.s32.totalorder %s23, 0
    %p170 = por %p168, %p169
    %p171 = scmp.ne.s32.totalorder %s159, %s160
    %p172 = scmp.eq.s32.totalorder %s24, 1
    %p173 = por %p171, %p172
    %p175 = scmp.ne.s32.totalorder %s160, %s174
    %p176 = scmp.eq.s32.totalorder %s24, 0
    %p177 = por %p175, %p176
    %s179 = sadd.s32 %s178, 1
    %p182 = scmp.eq.s32.totalorder %s18, 1
    %p183 = scmp.ne.s32.totalorder %s178, %s180
    %p184 = scmp.eq.s32.totalorder %s18, 0
    %p185 = por %p183, %p184
    %p186 = scmp.ne.s32.totalorder %s178, %s180
    %p187 = scmp.eq.s32.totalorder %s23, 1
    %p188 = por %p186, %p187
    %p189 = scmp.ne.s32.totalorder %s180, %s181
    %p190 = scmp.eq.s32.totalorder %s23, 0
    %p191 = por %p189, %p190
    %p192 = scmp.ne.s32.totalorder %s180, %s181
    %p193 = scmp.eq.s32.totalorder %s24, 1
    %p194 = por %p192, %p193
    %p196 = scmp.ne.s32.totalorder %s181, %s195
    %p197 = scmp.eq.s32.totalorder %s24, 0
    %p198 = por %p196, %p197
    %s200 = sadd.s32 %s199, 1
    %p203 = scmp.eq.s32.totalorder %s18, 1
    %p204 = scmp.ne.s32.totalorder %s199, %s201
    %p205 = scmp.eq.s32.totalorder %s18, 0
    %p206 = por %p204, %p205
    %p207 = scmp.ne.s32.totalorder %s199, %s201
    %p208 = scmp.eq.s32.totalorder %s23, 1
    %p209 = por %p207, %p208
    %p210 = scmp.ne.s32.totalorder %s201, %s202
    %p211 = scmp.eq.s32.totalorder %s23, 0
    %p212 = por %p210, %p211
    %p213 = scmp.ne.s32.totalorder %s201, %s202
    %p214 = scmp.eq.s32.totalorder %s24, 1
    %p215 = por %p213, %p214
    %p217 = scmp.ne.s32.totalorder %s202, %s216
    %p218 = scmp.eq.s32.totalorder %s24, 0
    %p219 = por %p217, %p218
    %s221 = sadd.s32 %s220, 1
    %p224 = scmp.eq.s32.totalorder %s18, 1
    %p225 = scmp.ne.s32.totalorder %s220, %s222
    %p226 = scmp.eq.s32.totalorder %s18, 0
    %p227 = por %p225, %p226
    %p228 = scmp.ne.s32.totalorder %s220, %s222
    %p229 = scmp.eq.s32.totalorder %s23, 1
    %p230 = por %p228, %p229
    %p231 = scmp.ne.s32.totalorder %s222, %s223
    %p232 = scmp.eq.s32.totalorder %s23, 0
    %p233 = por %p231, %p232
    %p234 = scmp.ne.s32.totalorder %s222, %s223
    %p235 = scmp.eq.s32.totalorder %s24, 1
    %p236 = por %p234, %p235
    %p238 = scmp.ne.s32.totalorder %s223, %s237
    %p239 = scmp.eq.s32.totalorder %s24, 0
    %p240 = por %p238, %p239
    %s242 = sadd.s32 %s241, 1
    %p245 = scmp.eq.s32.totalorder %s18, 1
    %p246 = scmp.ne.s32.totalorder %s241, %s243
    %p247 = scmp.eq.s32.totalorder %s18, 0
    %p248 = por %p246, %p247
    %p249 = scmp.ne.s32.totalorder %s241, %s243
    %p250 = scmp.eq.s32.totalorder %s23, 1
    %p251 = por %p249, %p250
    %p252 = scmp.ne.s32.totalorder %s243, %s244
    %p253 = scmp.eq.s32.totalorder %s23, 0
    %p254 = por %p252, %p253
    %p255 = scmp.ne.s32.totalorder %s243, %s244
    %p256 = scmp.eq.s32.totalorder %s24, 1
    %p257 = por %p255, %p256
    %p259 = scmp.ne.s32.totalorder %s244, %s258
    %p260 = scmp.eq.s32.totalorder %s24, 0
    %p261 = por %p259, %p260
    %s263 = sadd.s32 %s262, 1
    %p266 = scmp.eq.s32.totalorder %s18, 1
    %p267 = scmp.ne.s32.totalorder %s262, %s264
    %p268 = scmp.eq.s32.totalorder %s18, 0
    %p269 = por %p267, %p268
    %p270 = scmp.ne.s32.totalorder %s262, %s264
    %p271 = scmp.eq.s32.totalorder %s23, 1
    %p272 = por %p270, %p271
    %p273 = scmp.ne.s32.totalorder %s264, %s265
    %p274 = scmp.eq.s32.totalorder %s23, 0
    %p275 = por %p273, %p274
    %p276 = scmp.ne.s32.totalorder %s264, %s265
    %p277 = scmp.eq.s32.totalorder %s24, 1
    %p278 = por %p276, %p277
    %p280 = scmp.ne.s32.totalorder %s265, %s279
    %p281 = scmp.eq.s32.totalorder %s24, 0
    %p282 = por %p280, %p281
    %s283 = ssub.s32 %s18, %s25
    %p284 = scmp.eq.s32.totalorder %s283, 0
    %s286 = sadd.s32 %s285, 1
    %s287 = scalar_select %p284, %s285, %s286
    %p290 = pneg %p284
    %p291 = scmp.eq.s32.totalorder %s18, 1
    %p292 = por %p290, %p291
    %p293 = scmp.ne.s32.totalorder %s285, %s288
    %p294 = scmp.eq.s32.totalorder %s18, 0
    %p295 = por %p293, %p294
    %p296 = scmp.ne.s32.totalorder %s285, %s288
    %p297 = scmp.eq.s32.totalorder %s23, 1
    %p298 = por %p296, %p297
    %p299 = scmp.ne.s32.totalorder %s288, %s289
    %p300 = scmp.eq.s32.totalorder %s23, 0
    %p301 = por %p299, %p300
    %p302 = scmp.ne.s32.totalorder %s288, %s289
    %p303 = scmp.eq.s32.totalorder %s24, 1
    %p304 = por %p302, %p303
    %p306 = scmp.ne.s32.totalorder %s289, %s305
    %p307 = scmp.eq.s32.totalorder %s24, 0
    %p308 = por %p306, %p307
    %p309 = scmp.le.s32.totalorder 1, %s18
    %p310 = scmp.lt.s32.totalorder %s18, 3
    %p311 = pnand %p309, %p310
    %p312 = pneg %p311
    // Predicated region
    $region9: #{mmit_forward_fused.1} parent=5 // pred_check
      _
    $region10: #{mmit_forward_fused.1} parent=5 // pred_check_branch
      %314 = sbr.rel (%p311) target = $region12
    $region11: #{mmit_forward_fused.1} parent=5 // pred_region
      %s315 = ssub.s32 %s18, 1
      // Predicated region
      $region13: #{mmit_forward_fused.1} parent=11 // pred_check
        %p316 = pneg %p65
      $region14: #{mmit_forward_fused.1} parent=11 // pred_check_branch
        %318 = sbr.rel (%p316) target = $region16
      $region15: #{mmit_forward_fused.1} parent=11 // pred_region
        _
      $region16: #{mmit_forward_fused.1} parent=11 // pred_fallthru
        _
      // Predicated region
      $region17: #{mmit_forward_fused.1} parent=11 // pred_check
        %p319 = pneg %p86
      $region18: #{mmit_forward_fused.1} parent=11 // pred_check_branch
        %321 = sbr.rel (%p319) target = $region20
      $region19: #{mmit_forward_fused.1} parent=11 // pred_region
        _
      $region20: #{mmit_forward_fused.1} parent=11 // pred_fallthru
        _
      // Predicated region
      $region21: #{mmit_forward_fused.1} parent=11 // pred_check
        %p322 = pneg %p107
      $region22: #{mmit_forward_fused.1} parent=11 // pred_check_branch
        %324 = sbr.rel (%p322) target = $region24
      $region23: #{mmit_forward_fused.1} parent=11 // pred_region
        _
      $region24: #{mmit_forward_fused.1} parent=11 // pred_fallthru
        _
      // Predicated region
      $region25: #{mmit_forward_fused.1} parent=11 // pred_check
        %p325 = pneg %p128
      $region26: #{mmit_forward_fused.1} parent=11 // pred_check_branch
        %327 = sbr.rel (%p325) target = $region28
      $region27: #{mmit_forward_fused.1} parent=11 // pred_region
        _
      $region28: #{mmit_forward_fused.1} parent=11 // pred_fallthru
        _
      // Predicated region
      $region29: #{mmit_forward_fused.1} parent=11 // pred_check
        %p328 = pneg %p149
      $region30: #{mmit_forward_fused.1} parent=11 // pred_check_branch
        %330 = sbr.rel (%p328) target = $region32
      $region31: #{mmit_forward_fused.1} parent=11 // pred_region
        _
      $region32: #{mmit_forward_fused.1} parent=11 // pred_fallthru
        _
      // Predicated region
      $region33: #{mmit_forward_fused.1} parent=11 // pred_check
        %p331 = pneg %p170
      $region34: #{mmit_forward_fused.1} parent=11 // pred_check_branch
        %333 = sbr.rel (%p331) target = $region36
      $region35: #{mmit_forward_fused.1} parent=11 // pred_region
        _
      $region36: #{mmit_forward_fused.1} parent=11 // pred_fallthru
        _
      // Predicated region
      $region37: #{mmit_forward_fused.1} parent=11 // pred_check
        %p334 = pneg %p191
      $region38: #{mmit_forward_fused.1} parent=11 // pred_check_branch
        %336 = sbr.rel (%p334) target = $region40
      $region39: #{mmit_forward_fused.1} parent=11 // pred_region
        _
      $region40: #{mmit_forward_fused.1} parent=11 // pred_fallthru
        _
      // Predicated region
      $region41: #{mmit_forward_fused.1} parent=11 // pred_check
        %p337 = pneg %p212
      $region42: #{mmit_forward_fused.1} parent=11 // pred_check_branch
        %339 = sbr.rel (%p337) target = $region44
      $region43: #{mmit_forward_fused.1} parent=11 // pred_region
        _
      $region44: #{mmit_forward_fused.1} parent=11 // pred_fallthru
        _
      // Predicated region
      $region45: #{mmit_forward_fused.1} parent=11 // pred_check
        %p340 = pneg %p233
      $region46: #{mmit_forward_fused.1} parent=11 // pred_check_branch
        %342 = sbr.rel (%p340) target = $region48
      $region47: #{mmit_forward_fused.1} parent=11 // pred_region
        _
      $region48: #{mmit_forward_fused.1} parent=11 // pred_fallthru
        _
      // Predicated region
      $region49: #{mmit_forward_fused.1} parent=11 // pred_check
        %p343 = pneg %p254
      $region50: #{mmit_forward_fused.1} parent=11 // pred_check_branch
        %345 = sbr.rel (%p343) target = $region52
      $region51: #{mmit_forward_fused.1} parent=11 // pred_region
        _
      $region52: #{mmit_forward_fused.1} parent=11 // pred_fallthru
        _
      // Predicated region
      $region53: #{mmit_forward_fused.1} parent=11 // pred_check
        %p346 = pneg %p275
      $region54: #{mmit_forward_fused.1} parent=11 // pred_check_branch
        %348 = sbr.rel (%p346) target = $region56
      $region55: #{mmit_forward_fused.1} parent=11 // pred_region
        _
      $region56: #{mmit_forward_fused.1} parent=11 // pred_fallthru
        _
    $region12: #{mmit_forward_fused.1} parent=5 // pred_fallthru
      _
    %p349 = scmp.lt.s32.totalorder %s18, 2
    // Predicated region
    $region57: #{mmit_forward_fused.1} parent=5 // pred_check
      %p350 = pneg %p349
    $region58: #{mmit_forward_fused.1} parent=5 // pred_check_branch
      %352 = sbr.rel (%p350) target = $region60
    $region59: #{mmit_forward_fused.1} parent=5 // pred_region
      // Predicated region
      $region61: #{mmit_forward_fused.1} parent=59 // pred_check
        %p353 = pneg %p38
      $region62: #{mmit_forward_fused.1} parent=59 // pred_check_branch
        %355 = sbr.rel (%p353) target = $region64
      $region63: #{mmit_forward_fused.1} parent=59 // pred_region
        %p356 = scmp.lt.s32.totalorder %s18, 1
        %s357 = scalar_select %p356, %s18, 1
        %s358 = smul.addr %s357, 2
        %s359 = smul.addr %s358, 8
        %s360 = scalar_lea.vmem %s0, %s359
      $region64: #{mmit_forward_fused.1} parent=59 // pred_fallthru
        _
    $region60: #{mmit_forward_fused.1} parent=5 // pred_fallthru
      _
    %p361 = scmp.le.s32.totalorder 1, %s18
    %p362 = scmp.lt.s32.totalorder %s18, 3
    %p363 = pnand %p361, %p362
    %p364 = pneg %p363
    // Predicated region
    $region65: #{mmit_forward_fused.1} parent=5 // pred_check
      _
    $region66: #{mmit_forward_fused.1} parent=5 // pred_check_branch
      %366 = sbr.rel (%p363) target = $region68
    $region67: #{mmit_forward_fused.1} parent=5 // pred_region
      %s367 = ssub.s32 %s18, 1
      %p368 = scmp.lt.s32.totalorder %s23, 1
      %s369 = scalar_select %p368, %s23, 1
      %s370 = smul.addr %s369, 2
      %s371 = smul.addr %s370, 8
      %s372 = scalar_lea.vmem %s0, %s371
      %p373 = pneg %p44
      %p374 = pneg %p41
      %p375 = pneg %p65
      %p376 = pneg %p62
      %p377 = pneg %p86
      %p378 = pneg %p83
      %p379 = pneg %p107
      %p380 = pneg %p104
      %p381 = pneg %p128
      %p382 = pneg %p125
      %p383 = pneg %p149
      %p384 = pneg %p146
      %p385 = pneg %p170
      %p386 = pneg %p167
      %p387 = pneg %p191
      %p388 = pneg %p188
      %p389 = pneg %p212
      %p390 = pneg %p209
      %p391 = pneg %p233
      %p392 = pneg %p230
      %p393 = pneg %p254
      %p394 = pneg %p251
      %p395 = pneg %p275
      %p396 = pneg %p272
      %p397 = pneg %p301
      %p398 = pneg %p298
      %p399 = scmp.lt.s32.totalorder %s23, 1
      %s400 = scalar_select %p399, %s23, 1
      %s401 = smul.addr %s400, 2
      %s402 = smul.addr %s401, 4
      %s403 = scalar_lea.vmem %s12, %s402
      %p404 = scmp.lt.s32.totalorder %s23, 1
      %s405 = scalar_select %p404, %s23, 1
      %s406 = smul.addr %s405, 2
      %s407 = smul.addr %s406, 8
      %s408 = scalar_lea.vmem %s0, %s407
      %p409 = scmp.lt.s32.totalorder %s23, 1
      %s410 = scalar_select %p409, %s23, 1
      %s411 = smul.addr %s410, 2
      %s412 = smul.addr %s411, 4
      %s413 = scalar_lea.vmem %s12, %s412
      %v415 = vld [vmem:[%s1] sm:$0xff]
      %v416 = vld [vmem:[%s1 + $0x8] sm:$0xff]
      %v417 = vld [vmem:[%s1 + $0x10] sm:$0x1]
      %v418 = vld [vmem:[%s1 + $0x18] sm:$0x1]
      %v419 = vld [vmem:[%s2] sm:$0x3]
      %v420 = vld [vmem:[%s3] sm:$0x3]
      %v421 = vld [vmem:[%s5] sm:$0xff]
      %v422 = vld [vmem:[%s7] sm:$0xff]
      %v423 = vld [vmem:[%s7 + $0x8] sm:$0xff]
      %v424 = vld [vmem:[%s9] sm:$0xff]
      %v425 = vld [vmem:[%s9 + $0x8] sm:$0xff]
      %v426 = vld [vmem:[%s11] sm:$0x7]
      %v427 = vld [vmem:[%s408] sm:$0xff]
      %v428 = vld [vmem:[%s408 + $0x8] sm:$0xff]
      %429 = vrot.lane.b32.xlu0 %v427, 17
      %v430 = vpop.permute.xlu0 %429
      %431 = vrot.lane.b32.xlu0 %v428, 17
      %v432 = vpop.permute.xlu0 %431
      %v433 = vlaneseq
      %v434 = vand.u32 %v433, 127
      %vm435 = vcmp.lt.s32.totalorder %v434, 17
      %v436 = vsel %vm435, %v430, %v432
      %v437 = vsel %vm435, %v432, %v430
      %v438 = vperm.slane %v415, 0
      %v439 = vperm.slane %v416, 0
      %v440 = vmul.f32 %v437, %v438
      %v441 = vmul.f32 %v436, %v439
      %v442 = vpack.c.bf16 %v441, %v440
      %443 = vst [vmem:[#allocation2] sm:$0xff] %v442
      %444 = vrot.lane.b32.xlu0 %v427, 16
      %v445 = vpop.permute.xlu0 %444
      %446 = vrot.lane.b32.xlu0 %v428, 16
      %v447 = vpop.permute.xlu0 %446
      %vm448 = vcmp.lt.s32.totalorder %v434, 16
      %v449 = vsel %vm448, %v445, %v447
      %v450 = vsel %vm448, %v447, %v445
      %v451 = vperm.slane %v415, 1
      %v452 = vperm.slane %v416, 1
      %v453 = vmul.f32 %v450, %v451
      %v454 = vmul.f32 %v449, %v452
      %v455 = vpack.c.bf16 %v454, %v453
      %456 = vst [vmem:[#allocation2 + $0x8] sm:$0xff] %v455
      %457 = vrot.lane.b32.xlu0 %v427, 15
      %v458 = vpop.permute.xlu0 %457
      %459 = vrot.lane.b32.xlu0 %v428, 15
      %v460 = vpop.permute.xlu0 %459
      %vm461 = vcmp.lt.s32.totalorder %v434, 15
      %v462 = vsel %vm461, %v458, %v460
      %v463 = vsel %vm461, %v460, %v458
      %v464 = vperm.slane %v415, 2
      %v465 = vperm.slane %v416, 2
      %v466 = vmul.f32 %v463, %v464
      %v467 = vmul.f32 %v462, %v465
      %v468 = vpack.c.bf16 %v467, %v466
      %469 = vst [vmem:[#allocation2 + $0x10] sm:$0xff] %v468
      %470 = vrot.lane.b32.xlu0 %v427, 1
      %v471 = vpop.permute.xlu0 %470
      %472 = vrot.lane.b32.xlu0 %v428, 1
      %v473 = vpop.permute.xlu0 %472
      %vm474 = vcmp.lt.s32.totalorder %v434, 1
      %v475 = vsel %vm474, %v471, %v473
      %v476 = vsel %vm474, %v473, %v471
      %v477 = vperm.slane %v415, 3
      %v478 = vperm.slane %v416, 3
      %v479 = vmul.f32 %v476, %v477
      %v480 = vmul.f32 %v475, %v478
      %v481 = vpack.c.bf16 %v480, %v479
      %482 = vst [vmem:[#allocation2 + $0x18] sm:$0xff] %v481
      %v483 = vpack.c.bf16 %v428, %v427
      %484 = vst [vmem:[#allocation2 + $0x20] sm:$0xff] %v483
      %485 = vrot.lane.b32.xlu0 %v427, 127
      %v486 = vpop.permute.xlu0 %485
      %487 = vrot.lane.b32.xlu0 %v428, 127
      %v488 = vpop.permute.xlu0 %487
      %vm489 = vcmp.lt.s32.totalorder %v434, 127
      %v490 = vsel %vm489, %v486, %v488
      %v491 = vsel %vm489, %v488, %v486
      %v492 = vperm.slane %v415, 5
      %v493 = vperm.slane %v416, 5
      %v494 = vmul.f32 %v490, %v492
      %v495 = vmul.f32 %v491, %v493
      %v496 = vpack.c.bf16 %v495, %v494
      %497 = vst [vmem:[#allocation2 + $0x28] sm:$0xff] %v496
      %498 = vrot.lane.b32.xlu0 %v427, 113
      %v499 = vpop.permute.xlu0 %498
      %500 = vrot.lane.b32.xlu0 %v428, 113
      %v501 = vpop.permute.xlu0 %500
      %vm502 = vcmp.lt.s32.totalorder %v434, 113
      %v503 = vsel %vm502, %v499, %v501
      %v504 = vsel %vm502, %v501, %v499
      %v505 = vperm.slane %v415, 6
      %v506 = vperm.slane %v416, 6
      %v507 = vmul.f32 %v503, %v505
      %v508 = vmul.f32 %v504, %v506
      %v509 = vpack.c.bf16 %v508, %v507
      %510 = vst [vmem:[#allocation2 + $0x30] sm:$0xff] %v509
      %511 = vrot.lane.b32.xlu0 %v427, 112
      %v512 = vpop.permute.xlu0 %511
      %513 = vrot.lane.b32.xlu0 %v428, 112
      %v514 = vpop.permute.xlu0 %513
      %vm515 = vcmp.lt.s32.totalorder %v434, 112
      %v516 = vsel %vm515, %v512, %v514
      %v517 = vsel %vm515, %v514, %v512
      %v518 = vperm.slane %v415, 7
      %v519 = vperm.slane %v416, 7
      %v520 = vmul.f32 %v516, %v518
      %v521 = vmul.f32 %v517, %v519
      %v522 = vpack.c.bf16 %v521, %v520
      %523 = vst [vmem:[#allocation2 + $0x38] sm:$0xff] %v522
      %524 = vrot.lane.b32.xlu0 %v427, 111
      %v525 = vpop.permute.xlu0 %524
      %526 = vrot.lane.b32.xlu0 %v428, 111
      %v527 = vpop.permute.xlu0 %526
      %vm528 = vcmp.lt.s32.totalorder %v434, 111
      %v529 = vsel %vm528, %v525, %v527
      %v530 = vsel %vm528, %v527, %v525
      %v531 = vperm.slane %v417, 0
      %v532 = vperm.slane %v418, 0
      %v533 = vmul.f32 %v529, %v531
      %v534 = vmul.f32 %v530, %v532
      %v535 = vpack.c.bf16 %v534, %v533
      %536 = vst [vmem:[#allocation2 + $0x40] sm:$0xff] %v535
      %v537 = vld [vmem:[%s4] sm:$0xf]
      %v538 = vld [vmem:[#allocation2] sm:$0xff]
      %v539 = vld [vmem:[#allocation2 + $0x8] sm:$0xff]
      %v540 = vld [vmem:[#allocation2 + $0x10] sm:$0xff]
      %v541 = vld [vmem:[#allocation2 + $0x18] sm:$0xff]
      %v542 = vld [vmem:[#allocation2 + $0x20] sm:$0xff]
      %v543 = vld [vmem:[#allocation2 + $0x28] sm:$0xff]
      %v544 = vld [vmem:[#allocation2 + $0x30] sm:$0xff]
      %v545 = vld [vmem:[#allocation2 + $0x38] sm:$0xff]
      %v546 = vld [vmem:[#allocation2 + $0x40] sm:$0xff]
      %548 = vset.pattern.permute.xlu0 0
      %549 = vperm.xlu0 %548, %v421
      %v550 = vpop.permute.xlu0 %549
      %v561 = vunpack.c.l.b16 %v538
      %v562 = vunpack.c.h.b16 %v538
      %v563 = vunpack.c.l.b16 %v539
      %v564 = vunpack.c.h.b16 %v539
      %v565 = vunpack.c.l.b16 %v540
      %v566 = vunpack.c.h.b16 %v540
      %v567 = vunpack.c.l.b16 %v541
      %v568 = vunpack.c.h.b16 %v541
      %v569 = vunpack.c.l.b16 %v542
      %v570 = vunpack.c.h.b16 %v542
      %v571 = vunpack.c.l.b16 %v543
      %v572 = vunpack.c.h.b16 %v543
      %v573 = vunpack.c.l.b16 %v544
      %v574 = vunpack.c.h.b16 %v544
      %v575 = vunpack.c.l.b16 %v545
      %v576 = vunpack.c.h.b16 %v545
      %v577 = vunpack.c.l.b16 %v546
      %v578 = vunpack.c.h.b16 %v546
      %v579 = vpack.c.b16 %v563, %v561
      %v580 = vpack.c.b16 %v564, %v562
      %v581 = vpack.c.b16 %v567, %v565
      %v582 = vpack.c.b16 %v568, %v566
      %v583 = vpack.c.b16 %v571, %v569
      %v584 = vpack.c.b16 %v572, %v570
      %v585 = vpack.c.b16 %v575, %v573
      %v586 = vpack.c.b16 %v576, %v574
      %v587 = vpack.c.b16 %v577, %v577
      %v588 = vpack.c.b16 %v578, %v578
      %vm597 = vcmask 588800
      %v599 = vsel %vm597, %v537, 0
      %vm601 = vcmask 1043456
      %v603 = vsel %vm601, %v587, 0
      %v606 = vsel %vm601, %v588, 0
      %608 = vmatpush.bf16.msra.mxu0 0
      %609 = vmatpush.bf16.msra.mxu0 0
      %610 = vmatpush.bf16.msra.mxu0 0
      %611 = vmatpush.bf16.msra.mxu0 %v603
      %612 = vmatpush.bf16.msra.mxu0 %v585
      %613 = vmatpush.bf16.msra.mxu0 %v583
      %614 = vmatpush.bf16.msra.mxu0 %v581
      %615 = vmatpush.bf16.msra.mxu0 %v579
      %616 = vmatmul.bf16.gmra.mxu0 %v599
      %v617 = vpop.f32.mrf.mxu0
      %v618 = vadd.f32 %v550, %v617
      %v619 = vpop.f32.mrf.mxu0
      %620 = vdwg.mxu0
      %621 = vmatpush.bf16.msra.mxu0 0
      %622 = vmatpush.bf16.msra.mxu0 0
      %623 = vmatpush.bf16.msra.mxu0 0
      %624 = vmatpush.bf16.msra.mxu0 %v606
      %625 = vmatpush.bf16.msra.mxu0 %v586
      %626 = vmatpush.bf16.msra.mxu0 %v584
      %627 = vmatpush.bf16.msra.mxu0 %v582
      %628 = vmatpush.bf16.msra.mxu0 %v580
      %629 = vmatmul.bf16.gmra.mxu0 %v599
      %v630 = vpop.f32.mrf.mxu0
      %v631 = vadd.f32 %v550, %v630
      %v632 = vpop.f32.mrf.mxu0
      %633 = vdwg.mxu0
      %v634 = vmax.f32 %v618, 0.0
      %v635 = vmax.f32 %v631, 0.0
      %636 = vrot.lane.b32.xlu0 %v634, 17
      %v637 = vpop.permute.xlu0 %636
      %638 = vrot.lane.b32.xlu0 %v635, 17
      %v639 = vpop.permute.xlu0 %638
      %v640 = vsel %vm435, %v637, %v639
      %v641 = vsel %vm435, %v639, %v637
      %v642 = vmul.f32 %v641, %v438
      %v643 = vmul.f32 %v640, %v439
      %v644 = vpack.c.bf16 %v643, %v642
      %645 = vst [vmem:[#allocation2] sm:$0xff] %v644
      %646 = vrot.lane.b32.xlu0 %v634, 16
      %v647 = vpop.permute.xlu0 %646
      %648 = vrot.lane.b32.xlu0 %v635, 16
      %v649 = vpop.permute.xlu0 %648
      %v650 = vsel %vm448, %v647, %v649
      %v651 = vsel %vm448, %v649, %v647
      %v652 = vmul.f32 %v651, %v451
      %v653 = vmul.f32 %v650, %v452
      %v654 = vpack.c.bf16 %v653, %v652
      %655 = vst [vmem:[#allocation2 + $0x8] sm:$0xff] %v654
      %656 = vrot.lane.b32.xlu0 %v634, 15
      %v657 = vpop.permute.xlu0 %656
      %658 = vrot.lane.b32.xlu0 %v635, 15
      %v659 = vpop.permute.xlu0 %658
      %v660 = vsel %vm461, %v657, %v659
      %v661 = vsel %vm461, %v659, %v657
      %v662 = vmul.f32 %v661, %v464
      %v663 = vmul.f32 %v660, %v465
      %v664 = vpack.c.bf16 %v663, %v662
      %665 = vst [vmem:[#allocation2 + $0x10] sm:$0xff] %v664
      %666 = vrot.lane.b32.xlu0 %v634, 1
      %v667 = vpop.permute.xlu0 %666
      %668 = vrot.lane.b32.xlu0 %v635, 1
      %v669 = vpop.permute.xlu0 %668
      %v670 = vsel %vm474, %v667, %v669
      %v671 = vsel %vm474, %v669, %v667
      %v672 = vmul.f32 %v671, %v477
      %v673 = vmul.f32 %v670, %v478
      %v674 = vpack.c.bf16 %v673, %v672
      %675 = vst [vmem:[#allocation2 + $0x18] sm:$0xff] %v674
      %v676 = vpack.c.bf16 %v635, %v634
      %677 = vst [vmem:[#allocation2 + $0x20] sm:$0xff] %v676
      %678 = vrot.lane.b32.xlu0 %v634, 127
      %v679 = vpop.permute.xlu0 %678
      %680 = vrot.lane.b32.xlu0 %v635, 127
      %v681 = vpop.permute.xlu0 %680
      %v682 = vsel %vm489, %v679, %v681
      %v683 = vsel %vm489, %v681, %v679
      %v684 = vmul.f32 %v682, %v492
      %v685 = vmul.f32 %v683, %v493
      %v686 = vpack.c.bf16 %v685, %v684
      %687 = vst [vmem:[#allocation2 + $0x28] sm:$0xff] %v686
      %688 = vrot.lane.b32.xlu0 %v634, 113
      %v689 = vpop.permute.xlu0 %688
      %690 = vrot.lane.b32.xlu0 %v635, 113
      %v691 = vpop.permute.xlu0 %690
      %v692 = vsel %vm502, %v689, %v691
      %v693 = vsel %vm502, %v691, %v689
      %v694 = vmul.f32 %v692, %v505
      %v695 = vmul.f32 %v693, %v506
      %v696 = vpack.c.bf16 %v695, %v694
      %697 = vst [vmem:[#allocation2 + $0x30] sm:$0xff] %v696
      %698 = vrot.lane.b32.xlu0 %v634, 112
      %v699 = vpop.permute.xlu0 %698
      %700 = vrot.lane.b32.xlu0 %v635, 112
      %v701 = vpop.permute.xlu0 %700
      %v702 = vsel %vm515, %v699, %v701
      %v703 = vsel %vm515, %v701, %v699
      %v704 = vmul.f32 %v702, %v518
      %v705 = vmul.f32 %v703, %v519
      %v706 = vpack.c.bf16 %v705, %v704
      %707 = vst [vmem:[#allocation2 + $0x38] sm:$0xff] %v706
      %708 = vrot.lane.b32.xlu0 %v634, 111
      %v709 = vpop.permute.xlu0 %708
      %710 = vrot.lane.b32.xlu0 %v635, 111
      %v711 = vpop.permute.xlu0 %710
      %v712 = vsel %vm528, %v709, %v711
      %v713 = vsel %vm528, %v711, %v709
      %v714 = vmul.f32 %v712, %v531
      %v715 = vmul.f32 %v713, %v532
      %v716 = vpack.c.bf16 %v715, %v714
      %717 = vst [vmem:[#allocation2 + $0x40] sm:$0xff] %v716
      %v718 = vld [vmem:[%s6] sm:$0xf]
      %v719 = vld [vmem:[%s6 + $0x4] sm:$0xf]
      %v720 = vld [vmem:[#allocation2] sm:$0xff]
      %v721 = vld [vmem:[#allocation2 + $0x8] sm:$0xff]
      %v722 = vld [vmem:[#allocation2 + $0x10] sm:$0xff]
      %v723 = vld [vmem:[#allocation2 + $0x18] sm:$0xff]
      %v724 = vld [vmem:[#allocation2 + $0x20] sm:$0xff]
      %v725 = vld [vmem:[#allocation2 + $0x28] sm:$0xff]
      %v726 = vld [vmem:[#allocation2 + $0x30] sm:$0xff]
      %v727 = vld [vmem:[#allocation2 + $0x38] sm:$0xff]
      %v728 = vld [vmem:[#allocation2 + $0x40] sm:$0xff]
      %730 = vset.pattern.permute.xlu0 0
      %731 = vperm.xlu0 %730, %v422
      %v732 = vpop.permute.xlu0 %731
      %735 = vset.pattern.permute.xlu0 0
      %736 = vperm.xlu0 %735, %v423
      %v737 = vpop.permute.xlu0 %736
      %v741 = vunpack.c.l.b16 %v718
      %v742 = vunpack.c.l.b16 %v719
      %v743 = vpack.c.b16 %v742, %v741
      %v753 = vunpack.c.l.b16 %v720
      %v754 = vunpack.c.h.b16 %v720
      %v755 = vunpack.c.l.b16 %v721
      %v756 = vunpack.c.h.b16 %v721
      %v757 = vunpack.c.l.b16 %v722
      %v758 = vunpack.c.h.b16 %v722
      %v759 = vunpack.c.l.b16 %v723
      %v760 = vunpack.c.h.b16 %v723
      %v761 = vunpack.c.l.b16 %v724
      %v762 = vunpack.c.h.b16 %v724
      %v763 = vunpack.c.l.b16 %v725
      %v764 = vunpack.c.h.b16 %v725
      %v765 = vunpack.c.l.b16 %v726
      %v766 = vunpack.c.h.b16 %v726
      %v767 = vunpack.c.l.b16 %v727
      %v768 = vunpack.c.h.b16 %v727
      %v769 = vunpack.c.l.b16 %v728
      %v770 = vunpack.c.h.b16 %v728
      %v771 = vpack.c.b16 %v755, %v753
      %v772 = vpack.c.b16 %v756, %v754
      %v773 = vpack.c.b16 %v759, %v757
      %v774 = vpack.c.b16 %v760, %v758
      %v775 = vpack.c.b16 %v763, %v761
      %v776 = vpack.c.b16 %v764, %v762
      %v777 = vpack.c.b16 %v767, %v765
      %v778 = vpack.c.b16 %v768, %v766
      %v779 = vpack.c.b16 %v769, %v769
      %v780 = vpack.c.b16 %v770, %v770
      %v790 = vsel %vm597, %v743, 0
      %v793 = vsel %vm601, %v779, 0
      %v796 = vsel %vm601, %v780, 0
      %798 = vmatpush.bf16.msra.mxu0 0
      %799 = vmatpush.bf16.msra.mxu0 0
      %800 = vmatpush.bf16.msra.mxu0 0
      %801 = vmatpush.bf16.msra.mxu0 %v793
      %802 = vmatpush.bf16.msra.mxu0 %v777
      %803 = vmatpush.bf16.msra.mxu0 %v775
      %804 = vmatpush.bf16.msra.mxu0 %v773
      %805 = vmatpush.bf16.msra.mxu0 %v771
      %806 = vmatmul.bf16.gmra.mxu0 %v790
      %v807 = vpop.f32.mrf.mxu0
      %v808 = vadd.f32 %v732, %v807
      %v809 = vpop.f32.mrf.mxu0
      %v810 = vadd.f32 %v737, %v809
      %811 = vdwg.mxu0
      %812 = vmatpush.bf16.msra.mxu0 0
      %813 = vmatpush.bf16.msra.mxu0 0
      %814 = vmatpush.bf16.msra.mxu0 0
      %815 = vmatpush.bf16.msra.mxu0 %v796
      %816 = vmatpush.bf16.msra.mxu0 %v778
      %817 = vmatpush.bf16.msra.mxu0 %v776
      %818 = vmatpush.bf16.msra.mxu0 %v774
      %819 = vmatpush.bf16.msra.mxu0 %v772
      %820 = vmatmul.bf16.gmra.mxu0 %v790
      %v821 = vpop.f32.mrf.mxu0
      %v822 = vadd.f32 %v732, %v821
      %v823 = vpop.f32.mrf.mxu0
      %v824 = vadd.f32 %v737, %v823
      %825 = vdwg.mxu0
      %v826 = vmax.f32 %v808, 0.0
      %v827 = vmax.f32 %v822, 0.0
      %v828 = vmax.f32 %v810, 0.0
      %v829 = vmax.f32 %v824, 0.0
      %830 = vrot.lane.b32.xlu0 %v826, 1
      %v831 = vpop.permute.xlu0 %830
      %832 = vrot.lane.b32.xlu0 %v828, 1
      %v833 = vpop.permute.xlu0 %832
      %834 = vrot.lane.b32.xlu0 %v827, 1
      %v835 = vpop.permute.xlu0 %834
      %836 = vrot.lane.b32.xlu0 %v829, 1
      %v837 = vpop.permute.xlu0 %836
      %v838 = vsel %vm474, %v831, %v835
      %v839 = vsel %vm474, %v833, %v837
      %v840 = vsel %vm474, %v835, %v831
      %v841 = vsel %vm474, %v837, %v833
      %v842 = vsub.f32 %v840, %v826
      %v843 = vsub.f32 %v838, %v827
      %v844 = vsub.f32 %v841, %v828
      %v845 = vsub.f32 %v839, %v829
      %v847 = vperm.slane %v419, 0
      %v848 = vperm.slane %v419, 1
      %v851 = vmul.f32 %v847, %v842
      %v852 = vmul.f32 %v848, %v843
      %v853 = vmul.f32 %v847, %v844
      %v854 = vmul.f32 %v848, %v845
      %v855 = vadd.f32 %v826, %v851
      %v856 = vadd.f32 %v827, %v852
      %v857 = vadd.f32 %v828, %v853
      %v858 = vadd.f32 %v829, %v854
      %859 = vrot.lane.b32.xlu0 %v855, 16
      %v860 = vpop.permute.xlu0 %859
      %861 = vrot.lane.b32.xlu0 %v857, 16
      %v862 = vpop.permute.xlu0 %861
      %863 = vrot.lane.b32.xlu0 %v856, 16
      %v864 = vpop.permute.xlu0 %863
      %865 = vrot.lane.b32.xlu0 %v858, 16
      %v866 = vpop.permute.xlu0 %865
      %v867 = vsel %vm448, %v860, %v864
      %v868 = vsel %vm448, %v862, %v866
      %v869 = vsel %vm448, %v864, %v860
      %v870 = vsel %vm448, %v866, %v862
      %v871 = vsub.f32 %v869, %v855
      %v872 = vsub.f32 %v867, %v856
      %v873 = vsub.f32 %v870, %v857
      %v874 = vsub.f32 %v868, %v858
      %v876 = vperm.slane %v420, 0
      %v877 = vperm.slane %v420, 1
      %v880 = vmul.f32 %v876, %v871
      %v881 = vmul.f32 %v877, %v872
      %v882 = vmul.f32 %v876, %v873
      %v883 = vmul.f32 %v877, %v874
      %v884 = vadd.f32 %v855, %v880
      %v885 = vadd.f32 %v856, %v881
      %v886 = vadd.f32 %v857, %v882
      %v887 = vadd.f32 %v858, %v883
      %888 = vrot.lane.b32.xlu0 %v884, 17
      %v889 = vpop.permute.xlu0 %888
      %890 = vrot.lane.b32.xlu0 %v886, 17
      %v891 = vpop.permute.xlu0 %890
      %892 = vrot.lane.b32.xlu0 %v885, 17
      %v893 = vpop.permute.xlu0 %892
      %894 = vrot.lane.b32.xlu0 %v887, 17
      %v895 = vpop.permute.xlu0 %894
      %v896 = vsel %vm435, %v889, %v893
      %v897 = vsel %vm435, %v891, %v895
      %v898 = vsel %vm435, %v893, %v889
      %v899 = vsel %vm435, %v895, %v891
      %v900 = vmul.f32 %v898, %v438
      %v901 = vmul.f32 %v896, %v439
      %v902 = vmul.f32 %v899, %v438
      %v903 = vmul.f32 %v897, %v439
      %v904 = vpack.c.bf16 %v901, %v900
      %v905 = vpack.c.bf16 %v903, %v902
      %906 = vst [vmem:[#allocation2 + $0x48] sm:$0xff] %v904
      %907 = vst [vmem:[#allocation2 + $0x50] sm:$0xff] %v905
      %908 = vrot.lane.b32.xlu0 %v884, 16
      %v909 = vpop.permute.xlu0 %908
      %910 = vrot.lane.b32.xlu0 %v886, 16
      %v911 = vpop.permute.xlu0 %910
      %912 = vrot.lane.b32.xlu0 %v885, 16
      %v913 = vpop.permute.xlu0 %912
      %914 = vrot.lane.b32.xlu0 %v887, 16
      %v915 = vpop.permute.xlu0 %914
      %v916 = vsel %vm448, %v909, %v913
      %v917 = vsel %vm448, %v911, %v915
      %v918 = vsel %vm448, %v913, %v909
      %v919 = vsel %vm448, %v915, %v911
      %v920 = vmul.f32 %v918, %v451
      %v921 = vmul.f32 %v916, %v452
      %v922 = vmul.f32 %v919, %v451
      %v923 = vmul.f32 %v917, %v452
      %v924 = vpack.c.bf16 %v921, %v920
      %v925 = vpack.c.bf16 %v923, %v922
      %926 = vst [vmem:[#allocation2 + $0x58] sm:$0xff] %v924
      %927 = vst [vmem:[#allocation2 + $0x60] sm:$0xff] %v925
      %928 = vrot.lane.b32.xlu0 %v884, 15
      %v929 = vpop.permute.xlu0 %928
      %930 = vrot.lane.b32.xlu0 %v886, 15
      %v931 = vpop.permute.xlu0 %930
      %932 = vrot.lane.b32.xlu0 %v885, 15
      %v933 = vpop.permute.xlu0 %932
      %934 = vrot.lane.b32.xlu0 %v887, 15
      %v935 = vpop.permute.xlu0 %934
      %v936 = vsel %vm461, %v929, %v933
      %v937 = vsel %vm461, %v931, %v935
      %v938 = vsel %vm461, %v933, %v929
      %v939 = vsel %vm461, %v935, %v931
      %v940 = vmul.f32 %v938, %v464
      %v941 = vmul.f32 %v936, %v465
      %v942 = vmul.f32 %v939, %v464
      %v943 = vmul.f32 %v937, %v465
      %v944 = vpack.c.bf16 %v941, %v940
      %v945 = vpack.c.bf16 %v943, %v942
      %946 = vst [vmem:[#allocation2 + $0x68] sm:$0xff] %v944
      %947 = vst [vmem:[#allocation2 + $0x70] sm:$0xff] %v945
      %948 = vrot.lane.b32.xlu0 %v884, 1
      %v949 = vpop.permute.xlu0 %948
      %950 = vrot.lane.b32.xlu0 %v886, 1
      %v951 = vpop.permute.xlu0 %950
      %952 = vrot.lane.b32.xlu0 %v885, 1
      %v953 = vpop.permute.xlu0 %952
      %954 = vrot.lane.b32.xlu0 %v887, 1
      %v955 = vpop.permute.xlu0 %954
      %v956 = vsel %vm474, %v949, %v953
      %v957 = vsel %vm474, %v951, %v955
      %v958 = vsel %vm474, %v953, %v949
      %v959 = vsel %vm474, %v955, %v951
      %v960 = vmul.f32 %v958, %v477
      %v961 = vmul.f32 %v956, %v478
      %v962 = vmul.f32 %v959, %v477
      %v963 = vmul.f32 %v957, %v478
      %v964 = vpack.c.bf16 %v961, %v960
      %v965 = vpack.c.bf16 %v963, %v962
      %966 = vst [vmem:[#allocation2 + $0x78] sm:$0xff] %v964
      %967 = vst [vmem:[#allocation2 + $0x80] sm:$0xff] %v965
      %v968 = vpack.c.bf16 %v885, %v884
      %v969 = vpack.c.bf16 %v887, %v886
      %970 = vst [vmem:[#allocation2 + $0x88] sm:$0xff] %v968
      %971 = vst [vmem:[#allocation2 + $0x90] sm:$0xff] %v969
      %972 = vrot.lane.b32.xlu0 %v884, 127
      %v973 = vpop.permute.xlu0 %972
      %974 = vrot.lane.b32.xlu0 %v886, 127
      %v975 = vpop.permute.xlu0 %974
      %976 = vrot.lane.b32.xlu0 %v885, 127
      %v977 = vpop.permute.xlu0 %976
      %978 = vrot.lane.b32.xlu0 %v887, 127
      %v979 = vpop.permute.xlu0 %978
      %v980 = vsel %vm489, %v973, %v977
      %v981 = vsel %vm489, %v975, %v979
      %v982 = vsel %vm489, %v977, %v973
      %v983 = vsel %vm489, %v979, %v975
      %v984 = vmul.f32 %v980, %v492
      %v985 = vmul.f32 %v982, %v493
      %v986 = vmul.f32 %v981, %v492
      %v987 = vmul.f32 %v983, %v493
      %v988 = vpack.c.bf16 %v985, %v984
      %v989 = vpack.c.bf16 %v987, %v986
      %990 = vst [vmem:[#allocation2 + $0x98] sm:$0xff] %v988
      %991 = vst [vmem:[#allocation2 + $0xa0] sm:$0xff] %v989
      %992 = vrot.lane.b32.xlu0 %v884, 113
      %v993 = vpop.permute.xlu0 %992
      %994 = vrot.lane.b32.xlu0 %v886, 113
      %v995 = vpop.permute.xlu0 %994
      %996 = vrot.lane.b32.xlu0 %v885, 113
      %v997 = vpop.permute.xlu0 %996
      %998 = vrot.lane.b32.xlu0 %v887, 113
      %v999 = vpop.permute.xlu0 %998
      %v1000 = vsel %vm502, %v993, %v997
      %v1001 = vsel %vm502, %v995, %v999
      %v1002 = vsel %vm502, %v997, %v993
      %v1003 = vsel %vm502, %v999, %v995
      %v1004 = vmul.f32 %v1000, %v505
      %v1005 = vmul.f32 %v1002, %v506
      %v1006 = vmul.f32 %v1001, %v505
      %v1007 = vmul.f32 %v1003, %v506
      %v1008 = vpack.c.bf16 %v1005, %v1004
      %v1009 = vpack.c.bf16 %v1007, %v1006
      %1010 = vst [vmem:[#allocation2 + $0xa8] sm:$0xff] %v1008
      %1011 = vst [vmem:[#allocation2 + $0xb0] sm:$0xff] %v1009
      %1012 = vrot.lane.b32.xlu0 %v884, 112
      %v1013 = vpop.permute.xlu0 %1012
      %1014 = vrot.lane.b32.xlu0 %v886, 112
      %v1015 = vpop.permute.xlu0 %1014
      %1016 = vrot.lane.b32.xlu0 %v885, 112
      %v1017 = vpop.permute.xlu0 %1016
      %1018 = vrot.lane.b32.xlu0 %v887, 112
      %v1019 = vpop.permute.xlu0 %1018
      %v1020 = vsel %vm515, %v1013, %v1017
      %v1021 = vsel %vm515, %v1015, %v1019
      %v1022 = vsel %vm515, %v1017, %v1013
      %v1023 = vsel %vm515, %v1019, %v1015
      %v1024 = vmul.f32 %v1020, %v518
      %v1025 = vmul.f32 %v1022, %v519
      %v1026 = vmul.f32 %v1021, %v518
      %v1027 = vmul.f32 %v1023, %v519
      %v1028 = vpack.c.bf16 %v1025, %v1024
      %v1029 = vpack.c.bf16 %v1027, %v1026
      %1030 = vst [vmem:[#allocation2 + $0xb8] sm:$0xff] %v1028
      %1031 = vst [vmem:[#allocation2 + $0xc0] sm:$0xff] %v1029
      %1032 = vrot.lane.b32.xlu0 %v884, 111
      %v1033 = vpop.permute.xlu0 %1032
      %1034 = vrot.lane.b32.xlu0 %v886, 111
      %v1035 = vpop.permute.xlu0 %1034
      %1036 = vrot.lane.b32.xlu0 %v885, 111
      %v1037 = vpop.permute.xlu0 %1036
      %1038 = vrot.lane.b32.xlu0 %v887, 111
      %v1039 = vpop.permute.xlu0 %1038
      %v1040 = vsel %vm528, %v1033, %v1037
      %v1041 = vsel %vm528, %v1035, %v1039
      %v1042 = vsel %vm528, %v1037, %v1033
      %v1043 = vsel %vm528, %v1039, %v1035
      %v1044 = vmul.f32 %v1040, %v531
      %v1045 = vmul.f32 %v1042, %v532
      %v1046 = vmul.f32 %v1041, %v531
      %v1047 = vmul.f32 %v1043, %v532
      %v1048 = vpack.c.bf16 %v1045, %v1044
      %v1049 = vpack.c.bf16 %v1047, %v1046
      %1050 = vst [vmem:[#allocation2 + $0xc8] sm:$0xff] %v1048
      %1051 = vst [vmem:[#allocation2 + $0xd0] sm:$0xff] %v1049
      %v1052 = vld [vmem:[%s8] sm:$0xff]
      %v1053 = vld [vmem:[%s8 + $0x8] sm:$0xff]
      %v1054 = vld [vmem:[#allocation2] sm:$0xff]
      %v1055 = vld [vmem:[#allocation2 + $0x8] sm:$0xff]
      %v1056 = vld [vmem:[#allocation2 + $0x10] sm:$0xff]
      %v1057 = vld [vmem:[#allocation2 + $0x18] sm:$0xff]
      %v1058 = vld [vmem:[#allocation2 + $0x20] sm:$0xff]
      %v1059 = vld [vmem:[#allocation2 + $0x28] sm:$0xff]
      %v1060 = vld [vmem:[#allocation2 + $0x30] sm:$0xff]
      %v1061 = vld [vmem:[#allocation2 + $0x38] sm:$0xff]
      %v1062 = vld [vmem:[#allocation2 + $0x40] sm:$0xff]
      %v1063 = vld [vmem:[#allocation2 + $0x48] sm:$0xff]
      %v1064 = vld [vmem:[#allocation2 + $0x50] sm:$0xff]
      %v1065 = vld [vmem:[#allocation2 + $0x58] sm:$0xff]
      %v1066 = vld [vmem:[#allocation2 + $0x60] sm:$0xff]
      %v1067 = vld [vmem:[#allocation2 + $0x68] sm:$0xff]
      %v1068 = vld [vmem:[#allocation2 + $0x70] sm:$0xff]
      %v1069 = vld [vmem:[#allocation2 + $0x78] sm:$0xff]
      %v1070 = vld [vmem:[#allocation2 + $0x80] sm:$0xff]
      %v1071 = vld [vmem:[#allocation2 + $0x88] sm:$0xff]
      %v1072 = vld [vmem:[#allocation2 + $0x90] sm:$0xff]
      %v1073 = vld [vmem:[#allocation2 + $0x98] sm:$0xff]
      %v1074 = vld [vmem:[#allocation2 + $0xa0] sm:$0xff]
      %v1075 = vld [vmem:[#allocation2 + $0xa8] sm:$0xff]
      %v1076 = vld [vmem:[#allocation2 + $0xb0] sm:$0xff]
      %v1077 = vld [vmem:[#allocation2 + $0xb8] sm:$0xff]
      %v1078 = vld [vmem:[#allocation2 + $0xc0] sm:$0xff]
      %v1079 = vld [vmem:[#allocation2 + $0xc8] sm:$0xff]
      %v1080 = vld [vmem:[#allocation2 + $0xd0] sm:$0xff]
      %1082 = vset.pattern.permute.xlu0 0
      %1083 = vperm.xlu0 %1082, %v424
      %v1084 = vpop.permute.xlu0 %1083
      %1087 = vset.pattern.permute.xlu0 0
      %1088 = vperm.xlu0 %1087, %v425
      %v1089 = vpop.permute.xlu0 %1088
      %v1093 = vunpack.c.l.b16 %v1052
      %v1094 = vunpack.c.h.b16 %v1052
      %v1095 = vunpack.c.l.b16 %v1053
      %v1096 = vunpack.c.h.b16 %v1053
      %v1097 = vpack.c.b16 %v1095, %v1093
      %v1098 = vpack.c.b16 %v1096, %v1094
      %v1127 = vunpack.c.l.b16 %v1054
      %v1128 = vunpack.c.h.b16 %v1054
      %v1129 = vunpack.c.l.b16 %v1055
      %v1130 = vunpack.c.h.b16 %v1055
      %v1131 = vunpack.c.l.b16 %v1056
      %v1132 = vunpack.c.h.b16 %v1056
      %v1133 = vunpack.c.l.b16 %v1057
      %v1134 = vunpack.c.h.b16 %v1057
      %v1135 = vunpack.c.l.b16 %v1058
      %v1136 = vunpack.c.h.b16 %v1058
      %v1137 = vunpack.c.l.b16 %v1059
      %v1138 = vunpack.c.h.b16 %v1059
      %v1139 = vunpack.c.l.b16 %v1060
      %v1140 = vunpack.c.h.b16 %v1060
      %v1141 = vunpack.c.l.b16 %v1061
      %v1142 = vunpack.c.h.b16 %v1061
      %v1143 = vunpack.c.l.b16 %v1062
      %v1144 = vunpack.c.h.b16 %v1062
      %v1145 = vunpack.c.l.b16 %v1063
      %v1146 = vunpack.c.h.b16 %v1063
      %v1147 = vunpack.c.l.b16 %v1064
      %v1148 = vunpack.c.h.b16 %v1064
      %v1149 = vunpack.c.l.b16 %v1065
      %v1150 = vunpack.c.h.b16 %v1065
      %v1151 = vunpack.c.l.b16 %v1066
      %v1152 = vunpack.c.h.b16 %v1066
      %v1153 = vunpack.c.l.b16 %v1067
      %v1154 = vunpack.c.h.b16 %v1067
      %v1155 = vunpack.c.l.b16 %v1068
      %v1156 = vunpack.c.h.b16 %v1068
      %v1157 = vunpack.c.l.b16 %v1069
      %v1158 = vunpack.c.h.b16 %v1069
      %v1159 = vunpack.c.l.b16 %v1070
      %v1160 = vunpack.c.h.b16 %v1070
      %v1161 = vunpack.c.l.b16 %v1071
      %v1162 = vunpack.c.h.b16 %v1071
      %v1163 = vunpack.c.l.b16 %v1072
      %v1164 = vunpack.c.h.b16 %v1072
      %v1165 = vunpack.c.l.b16 %v1073
      %v1166 = vunpack.c.h.b16 %v1073
      %v1167 = vunpack.c.l.b16 %v1074
      %v1168 = vunpack.c.h.b16 %v1074
      %v1169 = vunpack.c.l.b16 %v1075
      %v1170 = vunpack.c.h.b16 %v1075
      %v1171 = vunpack.c.l.b16 %v1076
      %v1172 = vunpack.c.h.b16 %v1076
      %v1173 = vunpack.c.l.b16 %v1077
      %v1174 = vunpack.c.h.b16 %v1077
      %v1175 = vunpack.c.l.b16 %v1078
      %v1176 = vunpack.c.h.b16 %v1078
      %v1177 = vunpack.c.l.b16 %v1079
      %v1178 = vunpack.c.h.b16 %v1079
      %v1179 = vunpack.c.l.b16 %v1080
      %v1180 = vunpack.c.h.b16 %v1080
      %v1181 = vpack.c.b16 %v1129, %v1127
      %v1182 = vpack.c.b16 %v1130, %v1128
      %v1183 = vpack.c.b16 %v1133, %v1131
      %v1184 = vpack.c.b16 %v1134, %v1132
      %v1185 = vpack.c.b16 %v1137, %v1135
      %v1186 = vpack.c.b16 %v1138, %v1136
      %v1187 = vpack.c.b16 %v1141, %v1139
      %v1188 = vpack.c.b16 %v1142, %v1140
      %v1189 = vpack.c.b16 %v1145, %v1143
      %v1190 = vpack.c.b16 %v1146, %v1144
      %v1191 = vpack.c.b16 %v1149, %v1147
      %v1192 = vpack.c.b16 %v1150, %v1148
      %v1193 = vpack.c.b16 %v1153, %v1151
      %v1194 = vpack.c.b16 %v1154, %v1152
      %v1195 = vpack.c.b16 %v1157, %v1155
      %v1196 = vpack.c.b16 %v1158, %v1156
      %v1197 = vpack.c.b16 %v1161, %v1159
      %v1198 = vpack.c.b16 %v1162, %v1160
      %v1199 = vpack.c.b16 %v1165, %v1163
      %v1200 = vpack.c.b16 %v1166, %v1164
      %v1201 = vpack.c.b16 %v1169, %v1167
      %v1202 = vpack.c.b16 %v1170, %v1168
      %v1203 = vpack.c.b16 %v1173, %v1171
      %v1204 = vpack.c.b16 %v1174, %v1172
      %v1205 = vpack.c.b16 %v1177, %v1175
      %v1206 = vpack.c.b16 %v1178, %v1176
      %v1207 = vpack.c.b16 %v1179, %v1179
      %v1208 = vpack.c.b16 %v1180, %v1180
      %vm1235 = vcmask 719872
      %v1237 = vsel %vm1235, %v1098, 0
      %v1240 = vsel %vm601, %v1207, 0
      %v1243 = vsel %vm601, %v1208, 0
      %1245 = vmatpush.bf16.msra.mxu0 %v1195
      %1246 = vmatpush.bf16.msra.mxu0 %v1193
      %1247 = vmatpush.bf16.msra.mxu0 %v1191
      %1248 = vmatpush.bf16.msra.mxu0 %v1189
      %1249 = vmatpush.bf16.msra.mxu0 %v1187
      %1250 = vmatpush.bf16.msra.mxu0 %v1185
      %1251 = vmatpush.bf16.msra.mxu0 %v1183
      %1252 = vmatpush.bf16.msra.mxu0 %v1181
      %1253 = vmatmul.bf16.gmra.mxu0 %v1097
      %v1254 = vpop.f32.mrf.mxu0
      %v1255 = vadd.f32 %v1084, %v1254
      %v1256 = vpop.f32.mrf.mxu0
      %v1257 = vadd.f32 %v1089, %v1256
      %1258 = vdwg.mxu0
      %1259 = vmatpush.bf16.msra.mxu0 0
      %1260 = vmatpush.bf16.msra.mxu0 0
      %1261 = vmatpush.bf16.msra.mxu0 %v1240
      %1262 = vmatpush.bf16.msra.mxu0 %v1205
      %1263 = vmatpush.bf16.msra.mxu0 %v1203
      %1264 = vmatpush.bf16.msra.mxu0 %v1201
      %1265 = vmatpush.bf16.msra.mxu0 %v1199
      %1266 = vmatpush.bf16.msra.mxu0 %v1197
      %1267 = vmatmul.bf16.gmra.mxu0 %v1237
      %v1268 = vpop.f32.mrf.mxu0
      %v1269 = vadd.f32 %v1255, %v1268
      %v1270 = vpop.f32.mrf.mxu0
      %v1271 = vadd.f32 %v1257, %v1270
      %1272 = vdwg.mxu0
      %1273 = vmatpush.bf16.msra.mxu0 %v1196
      %1274 = vmatpush.bf16.msra.mxu0 %v1194
      %1275 = vmatpush.bf16.msra.mxu0 %v1192
      %1276 = vmatpush.bf16.msra.mxu0 %v1190
      %1277 = vmatpush.bf16.msra.mxu0 %v1188
      %1278 = vmatpush.bf16.msra.mxu0 %v1186
      %1279 = vmatpush.bf16.msra.mxu0 %v1184
      %1280 = vmatpush.bf16.msra.mxu0 %v1182
      %1281 = vmatmul.bf16.gmra.mxu0 %v1097
      %v1282 = vpop.f32.mrf.mxu0
      %v1283 = vadd.f32 %v1084, %v1282
      %v1284 = vpop.f32.mrf.mxu0
      %v1285 = vadd.f32 %v1089, %v1284
      %1286 = vdwg.mxu0
      %1287 = vmatpush.bf16.msra.mxu0 0
      %1288 = vmatpush.bf16.msra.mxu0 0
      %1289 = vmatpush.bf16.msra.mxu0 %v1243
      %1290 = vmatpush.bf16.msra.mxu0 %v1206
      %1291 = vmatpush.bf16.msra.mxu0 %v1204
      %1292 = vmatpush.bf16.msra.mxu0 %v1202
      %1293 = vmatpush.bf16.msra.mxu0 %v1200
      %1294 = vmatpush.bf16.msra.mxu0 %v1198
      %1295 = vmatmul.bf16.gmra.mxu0 %v1237
      %v1296 = vpop.f32.mrf.mxu0
      %v1297 = vadd.f32 %v1283, %v1296
      %v1298 = vpop.f32.mrf.mxu0
      %v1299 = vadd.f32 %v1285, %v1298
      %1300 = vdwg.mxu0
      %v1301 = vmax.f32 %v1269, 0.0
      %v1302 = vmax.f32 %v1297, 0.0
      %v1303 = vmax.f32 %v1271, 0.0
      %v1304 = vmax.f32 %v1299, 0.0
      %v1305 = vld [vmem:[%s10] sm:$0x7]
      %1307 = vset.pattern.permute.xlu0 0
      %1308 = vperm.xlu0 %1307, %v426
      %v1309 = vpop.permute.xlu0 %1308
      %vm1311 = vcmask 130048
      %v1313 = vsel %vm1311, %v1305, 0
      %1315 = vmatpush.msra.mxu0 0.0
      %1316 = vmatpush.msra.mxu0 0.0
      %1317 = vmatpush.msra.mxu0 0.0
      %1318 = vmatpush.msra.mxu0 0.0
      %1319 = vmatpush.msra.mxu0 0.0
      %1320 = vmatpush.msra.mxu0 0.0
      %1321 = vmatpush.msra.mxu0 0.0
      %1322 = vmatpush.msra.mxu0 0.0
      %1323 = vmatpush.msra.mxu0 0.0
      %1324 = vmatpush.msra.mxu0 0.0
      %1325 = vmatpush.msra.mxu0 0.0
      %1326 = vmatpush.msra.mxu0 0.0
      %1327 = vmatpush.msra.mxu0 0.0
      %1328 = vmatpush.msra.mxu0 0.0
      %1329 = vmatpush.msra.mxu0 %v1303
      %1330 = vmatpush.msra.mxu0 %v1301
      %1331 = vmatmul.f32.gmra.mxu0 %v1313
      %v1332 = vpop.f32.mrf.mxu0
      %v1333 = vadd.f32 %v1309, %v1332
      %1334 = vdwg.mxu0
      %1335 = vmatpush.msra.mxu0 0.0
      %1336 = vmatpush.msra.mxu0 0.0
      %1337 = vmatpush.msra.mxu0 0.0
      %1338 = vmatpush.msra.mxu0 0.0
      %1339 = vmatpush.msra.mxu0 0.0
      %1340 = vmatpush.msra.mxu0 0.0
      %1341 = vmatpush.msra.mxu0 0.0
      %1342 = vmatpush.msra.mxu0 0.0
      %1343 = vmatpush.msra.mxu0 0.0
      %1344 = vmatpush.msra.mxu0 0.0
      %1345 = vmatpush.msra.mxu0 0.0
      %1346 = vmatpush.msra.mxu0 0.0
      %1347 = vmatpush.msra.mxu0 0.0
      %1348 = vmatpush.msra.mxu0 0.0
      %1349 = vmatpush.msra.mxu0 %v1304
      %1350 = vmatpush.msra.mxu0 %v1302
      %1351 = vmatmul.f32.gmra.mxu0 %v1313
      %v1352 = vpop.f32.mrf.mxu0
      %v1353 = vadd.f32 %v1309, %v1352
      %1354 = vdwg.mxu0
      %v1357 = vrot.slane %v1353, 4
      %v1358 = vsel %vm601, %v1333, %v1357
      %1360 = vst [vmem:[%s413] sm:$0x77] %v1358
      %p1361 = scmp.lt.s32.totalorder %s23, 1
      %s1362 = scalar_select %p1361, %s23, 1
      %s1363 = smul.addr %s1362, 2
      %s1364 = smul.addr %s1363, 4
      %s1365 = scalar_lea.vmem %s12, %s1364
      // Predicated region
      $region69: #{mmit_forward_fused.1} parent=67 // pred_check
        %p1366 = pneg %p298
      $region70: #{mmit_forward_fused.1} parent=67 // pred_check_branch
        %1368 = sbr.rel (%p1366) target = $region72
      $region71: #{mmit_forward_fused.1} parent=67 // pred_region
        _
      $region72: #{mmit_forward_fused.1} parent=67 // pred_fallthru
        _
    $region68: #{mmit_forward_fused.1} parent=5 // pred_fallthru
      _
    %p1369 = scmp.le.s32.totalorder 2, %s18
    // Predicated region
    $region73: #{mmit_forward_fused.1} parent=5 // pred_check
      %p1370 = pneg %p1369
    $region74: #{mmit_forward_fused.1} parent=5 // pred_check_branch
      %1372 = sbr.rel (%p1370) target = $region76
    $region75: #{mmit_forward_fused.1} parent=5 // pred_region
      %s1373 = ssub.s32 %s18, 2
      // Predicated region
      $region77: #{mmit_forward_fused.1} parent=75 // pred_check
        %p1374 = pneg %p304
      $region78: #{mmit_forward_fused.1} parent=75 // pred_check_branch
        %1376 = sbr.rel (%p1374) target = $region80
      $region79: #{mmit_forward_fused.1} parent=75 // pred_region
        %p1377 = scmp.lt.s32.totalorder %s24, 1
        %s1378 = scalar_select %p1377, %s24, 1
        %s1379 = smul.addr %s1378, 2
        %s1380 = smul.addr %s1379, 4
        %s1381 = scalar_lea.vmem %s12, %s1380
      $region80: #{mmit_forward_fused.1} parent=75 // pred_fallthru
        _
    $region76: #{mmit_forward_fused.1} parent=5 // pred_fallthru
      _
  $region6: #{mmit_forward_fused.1} parent=0 // loop_footer
    %s22 = sadd.s32 1, %s18
  $region7: #{mmit_forward_fused.1} parent=0 // loop_footer_branch
    %17 = sbr.rel target = $region3
  $region8: #{mmit_forward_fused.1} parent=0 // loop_exit
    _

</llo_original>
